<compile_context>
chip_gen: v7x
topology: tpu7x:2x2x1
jax: 0.10.0
libtpu: 0.0.40
codegen_flags: <defaults>
</compile_context>

<pallas_src>
import functools

import jax
import jax.numpy as jnp
from jax.experimental import pallas as pl
from jax.experimental.pallas import tpu as pltpu


LANE_PAD = 128  # lane-dense padding for the logits output (polarities 3 -> 128)


# ----------------------------------------------------------------------------
# Fused BERT_KG kernel: encoder layer + pooler + dropout(identity) + dense head
# ----------------------------------------------------------------------------
def _bert_kg_kernel(B, S, heads, eps,
                    emb_ref, eg_ref, eb_ref,
                    wqkv_ref, bqkv_ref, wo_ref, bo_ref,
                    ag_ref, ab_ref,
                    wi_ref, bi_ref, wf_ref, bf_ref,
                    fg_ref, fb_ref,
                    wp_ref, bp_ref, wd_ref, bd_ref,
                    o_ref):
    H = wo_ref.shape[0]
    Dh = H // heads
    scale = 1.0 / (Dh ** 0.5)
    bf16 = jnp.bfloat16

    def layernorm(v, g_ref, b_ref):
        # f32 elementwise chain (no bf16 VPU on v5e).
        mu = jnp.mean(v, axis=-1, keepdims=True)
        var = jnp.mean((v - mu) ** 2, axis=-1, keepdims=True)
        return (v - mu) * jax.lax.rsqrt(var + eps) * g_ref[...] + b_ref[...]

    # --- embedding layernorm ---
    x = layernorm(emb_ref[...], eg_ref, eb_ref)                        # [B*S, H] f32

    # --- fused QKV projection (single MXU pass, N = 3H); bf16 operands ---
    qkv = jnp.dot(x.astype(bf16), wqkv_ref[...],
                  preferred_element_type=jnp.float32) + bqkv_ref[...]  # [B*S, 3H] f32

    def head_view(block, h):
        # one contiguous lane slice per (q/k/v, head), then a cheap
        # leading-dim split [B*S, Dh] -> [B, S, Dh] (last dim unchanged).
        c = block * H + h * Dh
        return qkv[:, c:c + Dh].reshape(B, S, Dh).astype(bf16)

    # --- attention: batched over B with 3-D einsums; static unroll over heads.
    #     The head-merge + output projection are fused as an accumulation over
    #     heads of ctx_h @ wo[h*Dh:(h+1)*Dh, :]  (no concatenates). ---
    attn_acc = jnp.zeros((B * S, H), jnp.float32)
    for h in range(heads):
        qh = head_view(0, h)                                           # [B, S, Dh] bf16
        kh = head_view(1, h)
        vh = head_view(2, h)

        s = jnp.einsum('bqd,bkd->bqk', qh, kh,
                       preferred_element_type=jnp.float32) * scale     # [B, S, S] f32
        s = s - jnp.max(s, axis=-1, keepdims=True)
        p = jnp.exp(s)
        p = p * pl.reciprocal(jnp.sum(p, axis=-1, keepdims=True), approx=True)

        ctx_h = jnp.einsum('bqk,bkd->bqd', p.astype(bf16), vh,
                           preferred_element_type=jnp.float32)         # [B, S, Dh] f32

        attn_acc = attn_acc + jnp.dot(
            ctx_h.reshape(B * S, Dh).astype(bf16),
            wo_ref[h * Dh:(h + 1) * Dh, :],
            preferred_element_type=jnp.float32)                        # [B*S, H]

    attn_out = attn_acc + bo_ref[...]
    x1 = layernorm(x + attn_out, ag_ref, ab_ref)                       # [B*S, H] f32

    # --- FFN (gelu epilogue) + fused residual + layernorm ---
    # NOTE: tanh-approx GELU (exact erf GELU differs slightly from HF 'gelu').
    ffn_h = jax.nn.gelu(
        jnp.dot(x1.astype(bf16), wi_ref[...],
                preferred_element_type=jnp.float32) + bi_ref[...])     # [B*S, inter] f32
    ffn_out = jnp.dot(ffn_h.astype(bf16), wf_ref[...],
                      preferred_element_type=jnp.float32) + bf_ref[...]
    seq = layernorm(x1 + ffn_out, fg_ref, fb_ref)                      # [B*S, H] f32

    # --- pooler on [CLS] rows: leading-dim split + one static slice ---
    cls = seq.reshape(B, S, H)[:, 0:1, :].reshape(B, H)                # [B, H] f32
    pooled = jnp.tanh(
        jnp.dot(cls.astype(bf16), wp_ref[...],
                preferred_element_type=jnp.float32) + bp_ref[...])
    # TODO(synk): training-mode nn.Dropout would mask `pooled` in-kernel via
    # pltpu.prng_seed + pltpu.prng_random_bits; eval-mode identity keeps
    # determinism and matches the PyTorch module in eval().
    logits = jnp.dot(pooled.astype(bf16), wd_ref[...],
                     preferred_element_type=jnp.float32) + bd_ref[...]  # [B, 128]
    o_ref[...] = logits.astype(o_ref.dtype)


# ----------------------------------------------------------------------------
# Deterministic synthetic parameters (mirrors BERT + BERT_KG.__init__ shapes)
# ----------------------------------------------------------------------------
def init_params(key, *, vocab, type_vocab, max_pos, hidden, heads, inter, pol):
    ks = jax.random.split(key, 16)
    n = lambda k, shp: (0.02 * jax.random.normal(k, shp)).astype(jnp.float32)
    z = lambda shp: jnp.zeros(shp, jnp.float32)
    o = lambda shp: jnp.ones(shp, jnp.float32)
    bf = lambda a: a.astype(jnp.bfloat16)   # bf16 weight storage (halves DMA bytes)

    wq = n(ks[3], (hidden, hidden))
    wk = n(ks[4], (hidden, hidden))
    wv = n(ks[5], (hidden, hidden))
    wd = n(ks[10], (hidden, pol))                        # self.dense weight
    wd_pad = jnp.pad(wd, ((0, 0), (0, LANE_PAD - pol)))  # lane-dense output slab

    return {
        "word_emb": n(ks[0], (vocab, hidden)),
        "pos_emb": n(ks[1], (max_pos, hidden)),
        "seg_emb": n(ks[2], (type_vocab, hidden)),
        "emb_ln_g": o((1, hidden)), "emb_ln_b": z((1, hidden)),
        "w_qkv": bf(jnp.concatenate([wq, wk, wv], axis=1)),   # [H, 3H] bf16
        "b_qkv": z((1, 3 * hidden)),
        "wo": bf(n(ks[6], (hidden, hidden))), "bo": z((1, hidden)),
        "attn_ln_g": o((1, hidden)), "attn_ln_b": z((1, hidden)),
        "wi": bf(n(ks[7], (hidden, inter))), "bi": z((1, inter)),
        "wf": bf(n(ks[8], (inter, hidden))), "bf": z((1, hidden)),
        "ffn_ln_g": o((1, hidden)), "ffn_ln_b": z((1, hidden)),
        "wp": bf(n(ks[9], (hidden, hidden))), "bp": z((1, hidden)),   # pooler
        "wd_pad": bf(wd_pad), "bd_pad": z((1, LANE_PAD)),             # self.dense (padded)
        "heads": heads,
        "pol": pol,
    }


# ----------------------------------------------------------------------------
# BERT_KG forward
# ----------------------------------------------------------------------------
def bert_kg_forward(params, text_bert_indices, bert_segments_ids):
    B, S = text_bert_indices.shape
    H = params["word_emb"].shape[1]
    heads = params["heads"]
    pol = params["pol"]

    # TODO(synk): at real sizes, fuse this gather into the kernel with
    # PrefetchScalarGridSpec + pl.Element row gather to avoid the extra HBM
    # round trip of the [B*S, H] embedding tensor; negligible at toy shapes.
    emb = (
        jnp.take(params["word_emb"], text_bert_indices, axis=0)
        + params["pos_emb"][None, :S, :]
        + jnp.take(params["seg_emb"], bert_segments_ids, axis=0)
    ).reshape(B * S, H).astype(jnp.float32)

    args = [
        emb,
        params["emb_ln_g"], params["emb_ln_b"],
        params["w_qkv"], params["b_qkv"],
        params["wo"], params["bo"],
        params["attn_ln_g"], params["attn_ln_b"],
        params["wi"], params["bi"],
        params["wf"], params["bf"],
        params["ffn_ln_g"], params["ffn_ln_b"],
        params["wp"], params["bp"],
        params["wd_pad"], params["bd_pad"],
    ]

    # Gridless call: whole problem is one VMEM-resident block — no per-step
    # bookkeeping, no double-buffering of weights.
    logits_pad = pl.pallas_call(
        functools.partial(_bert_kg_kernel, B, S, heads, 1e-12),
        out_shape=jax.ShapeDtypeStruct((B, LANE_PAD), jnp.float32),
        in_specs=[pl.BlockSpec(memory_space=pltpu.MemorySpace.VMEM)
                  for _ in args],
        out_specs=pl.BlockSpec(memory_space=pltpu.MemorySpace.VMEM),
    )(*args)

    # slice the lane-padded logits slab back to [B, polarities_dim]
    return logits_pad[:, :pol]


# ----------------------------------------------------------------------------
if __name__ == "__main__":
    # small shapes: batch=2, seq=8, bert_dim=32, heads=2, intermediate=64,
    # vocab=30, polarities_dim=3
    B, S, H, HEADS, INTER = 2, 8, 32, 2, 64
    VOCAB, TYPE_VOCAB, MAX_POS, POL = 30, 2, 16, 3

    key = jax.random.PRNGKey(0)
    kp, ki, _ = jax.random.split(key, 3)

    params = init_params(
        kp, vocab=VOCAB, type_vocab=TYPE_VOCAB, max_pos=MAX_POS,
        hidden=H, heads=HEADS, inter=INTER, pol=POL,
    )

    text_bert_indices = jax.random.randint(ki, (B, S), 0, VOCAB, dtype=jnp.int32)
    bert_segments_ids = (jnp.arange(S)[None, :] >= S // 2).astype(jnp.int32)
    bert_segments_ids = jnp.broadcast_to(bert_segments_ids, (B, S))

    logits = bert_kg_forward(params, text_bert_indices, bert_segments_ids)
    jax.block_until_ready(logits)
    assert logits.shape == (B, POL) and logits.dtype == jnp.float32
    assert bool(jnp.all(jnp.isfinite(logits)))
    print("KERNEL_OK")
</pallas_src>

<mosaic_0001>
module attributes {stable_mosaic.version = 11 : i64} {
  func.func @_bert_kg_kernel(%arg0: memref<16x32xf32, #tpu.memory_space<vmem>>, %arg1: memref<1x32xf32, #tpu.memory_space<vmem>>, %arg2: memref<1x32xf32, #tpu.memory_space<vmem>>, %arg3: memref<32x96xbf16, #tpu.memory_space<vmem>>, %arg4: memref<1x96xf32, #tpu.memory_space<vmem>>, %arg5: memref<32x32xbf16, #tpu.memory_space<vmem>>, %arg6: memref<1x32xf32, #tpu.memory_space<vmem>>, %arg7: memref<1x32xf32, #tpu.memory_space<vmem>>, %arg8: memref<1x32xf32, #tpu.memory_space<vmem>>, %arg9: memref<32x64xbf16, #tpu.memory_space<vmem>>, %arg10: memref<1x64xf32, #tpu.memory_space<vmem>>, %arg11: memref<64x32xbf16, #tpu.memory_space<vmem>>, %arg12: memref<1x32xf32, #tpu.memory_space<vmem>>, %arg13: memref<1x32xf32, #tpu.memory_space<vmem>>, %arg14: memref<1x32xf32, #tpu.memory_space<vmem>>, %arg15: memref<32x32xbf16, #tpu.memory_space<vmem>>, %arg16: memref<1x32xf32, #tpu.memory_space<vmem>>, %arg17: memref<32x128xbf16, #tpu.memory_space<vmem>>, %arg18: memref<1x128xf32, #tpu.memory_space<vmem>>, %arg19: memref<2x128xf32, #tpu.memory_space<vmem>>) attributes {dimension_semantics = [], scalar_prefetch = 0 : i64, scratch_operands = 0 : i64, tpu.core_type = #tpu.core_type<tc>} {
    %c0 = arith.constant 0 : index
    %c0_0 = arith.constant 0 : index
    %0 = vector.load %arg0[%c0, %c0_0] : memref<16x32xf32, #tpu.memory_space<vmem>>, vector<16x32xf32>
    %cst = arith.constant dense<0.000000e+00> : vector<16xf32>
    %1 = vector.multi_reduction <add>, %0, %cst [1] : vector<16x32xf32> to vector<16xf32>
    %2 = vector.shape_cast %1 : vector<16xf32> to vector<16x1xf32>
    %cst_1 = arith.constant 3.200000e+01 : f32
    %3 = vector.broadcast %cst_1 : f32 to vector<16x1xf32>
    %4 = arith.divf %2, %3 : vector<16x1xf32>
    %5 = vector.broadcast %4 : vector<16x1xf32> to vector<16x32xf32>
    %6 = arith.subf %0, %5 : vector<16x32xf32>
    %7 = arith.mulf %6, %6 : vector<16x32xf32>
    %cst_2 = arith.constant dense<0.000000e+00> : vector<16xf32>
    %8 = vector.multi_reduction <add>, %7, %cst_2 [1] : vector<16x32xf32> to vector<16xf32>
    %9 = vector.shape_cast %8 : vector<16xf32> to vector<16x1xf32>
    %cst_3 = arith.constant 3.200000e+01 : f32
    %10 = vector.broadcast %cst_3 : f32 to vector<16x1xf32>
    %11 = arith.divf %9, %10 : vector<16x1xf32>
    %12 = vector.broadcast %4 : vector<16x1xf32> to vector<16x32xf32>
    %13 = arith.subf %0, %12 : vector<16x32xf32>
    %cst_4 = arith.constant 9.99999996E-13 : f32
    %14 = vector.broadcast %cst_4 : f32 to vector<16x1xf32>
    %15 = arith.addf %11, %14 : vector<16x1xf32>
    %16 = math.rsqrt %15 : vector<16x1xf32>
    %17 = vector.broadcast %16 : vector<16x1xf32> to vector<16x32xf32>
    %18 = arith.mulf %13, %17 : vector<16x32xf32>
    %c0_5 = arith.constant 0 : index
    %c0_6 = arith.constant 0 : index
    %19 = vector.load %arg1[%c0_5, %c0_6] : memref<1x32xf32, #tpu.memory_space<vmem>>, vector<1x32xf32>
    %20 = vector.broadcast %19 : vector<1x32xf32> to vector<16x32xf32>
    %21 = arith.mulf %18, %20 : vector<16x32xf32>
    %c0_7 = arith.constant 0 : index
    %c0_8 = arith.constant 0 : index
    %22 = vector.load %arg2[%c0_7, %c0_8] : memref<1x32xf32, #tpu.memory_space<vmem>>, vector<1x32xf32>
    %23 = vector.broadcast %22 : vector<1x32xf32> to vector<16x32xf32>
    %24 = arith.addf %21, %23 : vector<16x32xf32>
    %25 = arith.truncf %24 : vector<16x32xf32> to vector<16x32xbf16>
    %c0_9 = arith.constant 0 : index
    %c0_10 = arith.constant 0 : index
    %26 = vector.load %arg3[%c0_9, %c0_10] : memref<32x96xbf16, #tpu.memory_space<vmem>>, vector<32x96xbf16>
    %cst_11 = arith.constant dense<0.000000e+00> : vector<16x96xf32>
    %27 = tpu.matmul %25, %26, %cst_11 {dimension_numbers = #tpu.dot_dimension_numbers<[1], [0], [0], [1], [0, 0, 1, 1], [], []>} : vector<16x32xbf16>, vector<32x96xbf16>, vector<16x96xf32> -> vector<16x96xf32>
    %c0_12 = arith.constant 0 : index
    %c0_13 = arith.constant 0 : index
    %28 = vector.load %arg4[%c0_12, %c0_13] : memref<1x96xf32, #tpu.memory_space<vmem>>, vector<1x96xf32>
    %29 = vector.broadcast %28 : vector<1x96xf32> to vector<16x96xf32>
    %30 = arith.addf %27, %29 : vector<16x96xf32>
    %cst_14 = arith.constant 0.000000e+00 : f32
    %31 = vector.broadcast %cst_14 : f32 to vector<16x32xf32>
    %32 = vector.extract_strided_slice %30 {offsets = [0, 0], sizes = [16, 16], strides = [1, 1]} : vector<16x96xf32> to vector<16x16xf32>
    %33 = vector.shape_cast %32 : vector<16x16xf32> to vector<2x8x16xf32>
    %34 = arith.truncf %33 : vector<2x8x16xf32> to vector<2x8x16xbf16>
    %35 = vector.extract_strided_slice %30 {offsets = [0, 32], sizes = [16, 16], strides = [1, 1]} : vector<16x96xf32> to vector<16x16xf32>
    %36 = vector.shape_cast %35 : vector<16x16xf32> to vector<2x8x16xf32>
    %37 = arith.truncf %36 : vector<2x8x16xf32> to vector<2x8x16xbf16>
    %38 = vector.extract_strided_slice %30 {offsets = [0, 64], sizes = [16, 16], strides = [1, 1]} : vector<16x96xf32> to vector<16x16xf32>
    %39 = vector.shape_cast %38 : vector<16x16xf32> to vector<2x8x16xf32>
    %40 = arith.truncf %39 : vector<2x8x16xf32> to vector<2x8x16xbf16>
    "tpu.trace_start"() <{level = 10 : i32, message = "bqd,bkd->bqk"}> : () -> ()
    %cst_15 = arith.constant dense<0.000000e+00> : vector<2x8x8xf32>
    %41 = tpu.matmul %34, %37, %cst_15 {dimension_numbers = #tpu.dot_dimension_numbers<[2], [2], [1], [1], [0, 0, 0, 1, 1, 1], [0], [0]>} : vector<2x8x16xbf16>, vector<2x8x16xbf16>, vector<2x8x8xf32> -> vector<2x8x8xf32>
    "tpu.trace_stop"() : () -> ()
    %cst_16 = arith.constant 2.500000e-01 : f32
    %42 = vector.broadcast %cst_16 : f32 to vector<2x8x8xf32>
    %43 = arith.mulf %41, %42 : vector<2x8x8xf32>
    %cst_17 = arith.constant dense<0xFF800000> : vector<2x8xf32>
    %44 = vector.multi_reduction <maximumf>, %43, %cst_17 [2] : vector<2x8x8xf32> to vector<2x8xf32>
    %45 = vector.shape_cast %44 : vector<2x8xf32> to vector<2x8x1xf32>
    %46 = vector.broadcast %45 : vector<2x8x1xf32> to vector<2x8x8xf32>
    %47 = arith.subf %43, %46 : vector<2x8x8xf32>
    %48 = math.exp %47 : vector<2x8x8xf32>
    %cst_18 = arith.constant dense<0.000000e+00> : vector<2x8xf32>
    %49 = vector.multi_reduction <add>, %48, %cst_18 [2] : vector<2x8x8xf32> to vector<2x8xf32>
    %50 = vector.shape_cast %49 : vector<2x8xf32> to vector<2x8x1xf32>
    %51 = tpu.reciprocal %50 {approx = true} : vector<2x8x1xf32> -> vector<2x8x1xf32>
    %52 = vector.broadcast %51 : vector<2x8x1xf32> to vector<2x8x8xf32>
    %53 = arith.mulf %48, %52 : vector<2x8x8xf32>
    %54 = arith.truncf %53 : vector<2x8x8xf32> to vector<2x8x8xbf16>
    "tpu.trace_start"() <{level = 10 : i32, message = "bqk,bkd->bqd"}> : () -> ()
    %cst_19 = arith.constant dense<0.000000e+00> : vector<2x8x16xf32>
    %55 = tpu.matmul %54, %40, %cst_19 {dimension_numbers = #tpu.dot_dimension_numbers<[2], [1], [1], [2], [0, 0, 0, 1, 1, 2], [0], [0]>} : vector<2x8x8xbf16>, vector<2x8x16xbf16>, vector<2x8x16xf32> -> vector<2x8x16xf32>
    "tpu.trace_stop"() : () -> ()
    %56 = vector.shape_cast %55 : vector<2x8x16xf32> to vector<16x16xf32>
    %57 = arith.truncf %56 : vector<16x16xf32> to vector<16x16xbf16>
    %c0_20 = arith.constant 0 : index
    %c0_21 = arith.constant 0 : index
    %58 = vector.load %arg5[%c0_20, %c0_21] : memref<32x32xbf16, #tpu.memory_space<vmem>>, vector<16x32xbf16>
    %cst_22 = arith.constant dense<0.000000e+00> : vector<16x32xf32>
    %59 = tpu.matmul %57, %58, %cst_22 {dimension_numbers = #tpu.dot_dimension_numbers<[1], [0], [0], [1], [0, 0, 1, 1], [], []>} : vector<16x16xbf16>, vector<16x32xbf16>, vector<16x32xf32> -> vector<16x32xf32>
    %60 = arith.addf %31, %59 : vector<16x32xf32>
    %61 = vector.extract_strided_slice %30 {offsets = [0, 16], sizes = [16, 16], strides = [1, 1]} : vector<16x96xf32> to vector<16x16xf32>
    %62 = vector.shape_cast %61 : vector<16x16xf32> to vector<2x8x16xf32>
    %63 = arith.truncf %62 : vector<2x8x16xf32> to vector<2x8x16xbf16>
    %64 = vector.extract_strided_slice %30 {offsets = [0, 48], sizes = [16, 16], strides = [1, 1]} : vector<16x96xf32> to vector<16x16xf32>
    %65 = vector.shape_cast %64 : vector<16x16xf32> to vector<2x8x16xf32>
    %66 = arith.truncf %65 : vector<2x8x16xf32> to vector<2x8x16xbf16>
    %67 = vector.extract_strided_slice %30 {offsets = [0, 80], sizes = [16, 16], strides = [1, 1]} : vector<16x96xf32> to vector<16x16xf32>
    %68 = vector.shape_cast %67 : vector<16x16xf32> to vector<2x8x16xf32>
    %69 = arith.truncf %68 : vector<2x8x16xf32> to vector<2x8x16xbf16>
    "tpu.trace_start"() <{level = 10 : i32, message = "bqd,bkd->bqk"}> : () -> ()
    %cst_23 = arith.constant dense<0.000000e+00> : vector<2x8x8xf32>
    %70 = tpu.matmul %63, %66, %cst_23 {dimension_numbers = #tpu.dot_dimension_numbers<[2], [2], [1], [1], [0, 0, 0, 1, 1, 1], [0], [0]>} : vector<2x8x16xbf16>, vector<2x8x16xbf16>, vector<2x8x8xf32> -> vector<2x8x8xf32>
    "tpu.trace_stop"() : () -> ()
    %cst_24 = arith.constant 2.500000e-01 : f32
    %71 = vector.broadcast %cst_24 : f32 to vector<2x8x8xf32>
    %72 = arith.mulf %70, %71 : vector<2x8x8xf32>
    %cst_25 = arith.constant dense<0xFF800000> : vector<2x8xf32>
    %73 = vector.multi_reduction <maximumf>, %72, %cst_25 [2] : vector<2x8x8xf32> to vector<2x8xf32>
    %74 = vector.shape_cast %73 : vector<2x8xf32> to vector<2x8x1xf32>
    %75 = vector.broadcast %74 : vector<2x8x1xf32> to vector<2x8x8xf32>
    %76 = arith.subf %72, %75 : vector<2x8x8xf32>
    %77 = math.exp %76 : vector<2x8x8xf32>
    %cst_26 = arith.constant dense<0.000000e+00> : vector<2x8xf32>
    %78 = vector.multi_reduction <add>, %77, %cst_26 [2] : vector<2x8x8xf32> to vector<2x8xf32>
    %79 = vector.shape_cast %78 : vector<2x8xf32> to vector<2x8x1xf32>
    %80 = tpu.reciprocal %79 {approx = true} : vector<2x8x1xf32> -> vector<2x8x1xf32>
    %81 = vector.broadcast %80 : vector<2x8x1xf32> to vector<2x8x8xf32>
    %82 = arith.mulf %77, %81 : vector<2x8x8xf32>
    %83 = arith.truncf %82 : vector<2x8x8xf32> to vector<2x8x8xbf16>
    "tpu.trace_start"() <{level = 10 : i32, message = "bqk,bkd->bqd"}> : () -> ()
    %cst_27 = arith.constant dense<0.000000e+00> : vector<2x8x16xf32>
    %84 = tpu.matmul %83, %69, %cst_27 {dimension_numbers = #tpu.dot_dimension_numbers<[2], [1], [1], [2], [0, 0, 0, 1, 1, 2], [0], [0]>} : vector<2x8x8xbf16>, vector<2x8x16xbf16>, vector<2x8x16xf32> -> vector<2x8x16xf32>
    "tpu.trace_stop"() : () -> ()
    %85 = vector.shape_cast %84 : vector<2x8x16xf32> to vector<16x16xf32>
    %86 = arith.truncf %85 : vector<16x16xf32> to vector<16x16xbf16>
    %c16 = arith.constant 16 : index
    %c0_28 = arith.constant 0 : index
    %87 = vector.load %arg5[%c16, %c0_28] : memref<32x32xbf16, #tpu.memory_space<vmem>>, vector<16x32xbf16>
    %cst_29 = arith.constant dense<0.000000e+00> : vector<16x32xf32>
    %88 = tpu.matmul %86, %87, %cst_29 {dimension_numbers = #tpu.dot_dimension_numbers<[1], [0], [0], [1], [0, 0, 1, 1], [], []>} : vector<16x16xbf16>, vector<16x32xbf16>, vector<16x32xf32> -> vector<16x32xf32>
    %89 = arith.addf %60, %88 : vector<16x32xf32>
    %c0_30 = arith.constant 0 : index
    %c0_31 = arith.constant 0 : index
    %90 = vector.load %arg6[%c0_30, %c0_31] : memref<1x32xf32, #tpu.memory_space<vmem>>, vector<1x32xf32>
    %91 = vector.broadcast %90 : vector<1x32xf32> to vector<16x32xf32>
    %92 = arith.addf %89, %91 : vector<16x32xf32>
    %93 = arith.addf %24, %92 : vector<16x32xf32>
    %cst_32 = arith.constant dense<0.000000e+00> : vector<16xf32>
    %94 = vector.multi_reduction <add>, %93, %cst_32 [1] : vector<16x32xf32> to vector<16xf32>
    %95 = vector.shape_cast %94 : vector<16xf32> to vector<16x1xf32>
    %cst_33 = arith.constant 3.200000e+01 : f32
    %96 = vector.broadcast %cst_33 : f32 to vector<16x1xf32>
    %97 = arith.divf %95, %96 : vector<16x1xf32>
    %98 = vector.broadcast %97 : vector<16x1xf32> to vector<16x32xf32>
    %99 = arith.subf %93, %98 : vector<16x32xf32>
    %100 = arith.mulf %99, %99 : vector<16x32xf32>
    %cst_34 = arith.constant dense<0.000000e+00> : vector<16xf32>
    %101 = vector.multi_reduction <add>, %100, %cst_34 [1] : vector<16x32xf32> to vector<16xf32>
    %102 = vector.shape_cast %101 : vector<16xf32> to vector<16x1xf32>
    %cst_35 = arith.constant 3.200000e+01 : f32
    %103 = vector.broadcast %cst_35 : f32 to vector<16x1xf32>
    %104 = arith.divf %102, %103 : vector<16x1xf32>
    %105 = vector.broadcast %97 : vector<16x1xf32> to vector<16x32xf32>
    %106 = arith.subf %93, %105 : vector<16x32xf32>
    %cst_36 = arith.constant 9.99999996E-13 : f32
    %107 = vector.broadcast %cst_36 : f32 to vector<16x1xf32>
    %108 = arith.addf %104, %107 : vector<16x1xf32>
    %109 = math.rsqrt %108 : vector<16x1xf32>
    %110 = vector.broadcast %109 : vector<16x1xf32> to vector<16x32xf32>
    %111 = arith.mulf %106, %110 : vector<16x32xf32>
    %c0_37 = arith.constant 0 : index
    %c0_38 = arith.constant 0 : index
    %112 = vector.load %arg7[%c0_37, %c0_38] : memref<1x32xf32, #tpu.memory_space<vmem>>, vector<1x32xf32>
    %113 = vector.broadcast %112 : vector<1x32xf32> to vector<16x32xf32>
    %114 = arith.mulf %111, %113 : vector<16x32xf32>
    %c0_39 = arith.constant 0 : index
    %c0_40 = arith.constant 0 : index
    %115 = vector.load %arg8[%c0_39, %c0_40] : memref<1x32xf32, #tpu.memory_space<vmem>>, vector<1x32xf32>
    %116 = vector.broadcast %115 : vector<1x32xf32> to vector<16x32xf32>
    %117 = arith.addf %114, %116 : vector<16x32xf32>
    %118 = arith.truncf %117 : vector<16x32xf32> to vector<16x32xbf16>
    %c0_41 = arith.constant 0 : index
    %c0_42 = arith.constant 0 : index
    %119 = vector.load %arg9[%c0_41, %c0_42] : memref<32x64xbf16, #tpu.memory_space<vmem>>, vector<32x64xbf16>
    %cst_43 = arith.constant dense<0.000000e+00> : vector<16x64xf32>
    %120 = tpu.matmul %118, %119, %cst_43 {dimension_numbers = #tpu.dot_dimension_numbers<[1], [0], [0], [1], [0, 0, 1, 1], [], []>} : vector<16x32xbf16>, vector<32x64xbf16>, vector<16x64xf32> -> vector<16x64xf32>
    %c0_44 = arith.constant 0 : index
    %c0_45 = arith.constant 0 : index
    %121 = vector.load %arg10[%c0_44, %c0_45] : memref<1x64xf32, #tpu.memory_space<vmem>>, vector<1x64xf32>
    %122 = vector.broadcast %121 : vector<1x64xf32> to vector<16x64xf32>
    %123 = arith.addf %120, %122 : vector<16x64xf32>
    %124 = arith.mulf %123, %123 : vector<16x64xf32>
    %125 = arith.mulf %123, %124 : vector<16x64xf32>
    %cst_46 = arith.constant 4.471500e-02 : f32
    %126 = vector.broadcast %cst_46 : f32 to vector<16x64xf32>
    %127 = arith.mulf %126, %125 : vector<16x64xf32>
    %128 = arith.addf %123, %127 : vector<16x64xf32>
    %cst_47 = arith.constant 0.797884583 : f32
    %129 = vector.broadcast %cst_47 : f32 to vector<16x64xf32>
    %130 = arith.mulf %129, %128 : vector<16x64xf32>
    %131 = math.tanh %130 : vector<16x64xf32>
    %cst_48 = arith.constant 1.000000e+00 : f32
    %132 = vector.broadcast %cst_48 : f32 to vector<16x64xf32>
    %133 = arith.addf %132, %131 : vector<16x64xf32>
    %cst_49 = arith.constant 5.000000e-01 : f32
    %134 = vector.broadcast %cst_49 : f32 to vector<16x64xf32>
    %135 = arith.mulf %134, %133 : vector<16x64xf32>
    %136 = arith.mulf %123, %135 : vector<16x64xf32>
    %137 = arith.truncf %136 : vector<16x64xf32> to vector<16x64xbf16>
    %c0_50 = arith.constant 0 : index
    %c0_51 = arith.constant 0 : index
    %138 = vector.load %arg11[%c0_50, %c0_51] : memref<64x32xbf16, #tpu.memory_space<vmem>>, vector<64x32xbf16>
    %cst_52 = arith.constant dense<0.000000e+00> : vector<16x32xf32>
    %139 = tpu.matmul %137, %138, %cst_52 {dimension_numbers = #tpu.dot_dimension_numbers<[1], [0], [0], [1], [0, 0, 1, 1], [], []>} : vector<16x64xbf16>, vector<64x32xbf16>, vector<16x32xf32> -> vector<16x32xf32>
    %c0_53 = arith.constant 0 : index
    %c0_54 = arith.constant 0 : index
    %140 = vector.load %arg12[%c0_53, %c0_54] : memref<1x32xf32, #tpu.memory_space<vmem>>, vector<1x32xf32>
    %141 = vector.broadcast %140 : vector<1x32xf32> to vector<16x32xf32>
    %142 = arith.addf %139, %141 : vector<16x32xf32>
    %143 = arith.addf %117, %142 : vector<16x32xf32>
    %cst_55 = arith.constant dense<0.000000e+00> : vector<16xf32>
    %144 = vector.multi_reduction <add>, %143, %cst_55 [1] : vector<16x32xf32> to vector<16xf32>
    %145 = vector.shape_cast %144 : vector<16xf32> to vector<16x1xf32>
    %cst_56 = arith.constant 3.200000e+01 : f32
    %146 = vector.broadcast %cst_56 : f32 to vector<16x1xf32>
    %147 = arith.divf %145, %146 : vector<16x1xf32>
    %148 = vector.broadcast %147 : vector<16x1xf32> to vector<16x32xf32>
    %149 = arith.subf %143, %148 : vector<16x32xf32>
    %150 = arith.mulf %149, %149 : vector<16x32xf32>
    %cst_57 = arith.constant dense<0.000000e+00> : vector<16xf32>
    %151 = vector.multi_reduction <add>, %150, %cst_57 [1] : vector<16x32xf32> to vector<16xf32>
    %152 = vector.shape_cast %151 : vector<16xf32> to vector<16x1xf32>
    %cst_58 = arith.constant 3.200000e+01 : f32
    %153 = vector.broadcast %cst_58 : f32 to vector<16x1xf32>
    %154 = arith.divf %152, %153 : vector<16x1xf32>
    %155 = vector.broadcast %147 : vector<16x1xf32> to vector<16x32xf32>
    %156 = arith.subf %143, %155 : vector<16x32xf32>
    %cst_59 = arith.constant 9.99999996E-13 : f32
    %157 = vector.broadcast %cst_59 : f32 to vector<16x1xf32>
    %158 = arith.addf %154, %157 : vector<16x1xf32>
    %159 = math.rsqrt %158 : vector<16x1xf32>
    %160 = vector.broadcast %159 : vector<16x1xf32> to vector<16x32xf32>
    %161 = arith.mulf %156, %160 : vector<16x32xf32>
    %c0_60 = arith.constant 0 : index
    %c0_61 = arith.constant 0 : index
    %162 = vector.load %arg13[%c0_60, %c0_61] : memref<1x32xf32, #tpu.memory_space<vmem>>, vector<1x32xf32>
    %163 = vector.broadcast %162 : vector<1x32xf32> to vector<16x32xf32>
    %164 = arith.mulf %161, %163 : vector<16x32xf32>
    %c0_62 = arith.constant 0 : index
    %c0_63 = arith.constant 0 : index
    %165 = vector.load %arg14[%c0_62, %c0_63] : memref<1x32xf32, #tpu.memory_space<vmem>>, vector<1x32xf32>
    %166 = vector.broadcast %165 : vector<1x32xf32> to vector<16x32xf32>
    %167 = arith.addf %164, %166 : vector<16x32xf32>
    %168 = vector.shape_cast %167 : vector<16x32xf32> to vector<2x8x32xf32>
    %169 = vector.extract_strided_slice %168 {offsets = [0, 0, 0], sizes = [2, 1, 32], strides = [1, 1, 1]} : vector<2x8x32xf32> to vector<2x1x32xf32>
    %170 = vector.shape_cast %169 : vector<2x1x32xf32> to vector<2x32xf32>
    %171 = arith.truncf %170 : vector<2x32xf32> to vector<2x32xbf16>
    %c0_64 = arith.constant 0 : index
    %c0_65 = arith.constant 0 : index
    %172 = vector.load %arg15[%c0_64, %c0_65] : memref<32x32xbf16, #tpu.memory_space<vmem>>, vector<32x32xbf16>
    %cst_66 = arith.constant dense<0.000000e+00> : vector<2x32xf32>
    %173 = tpu.matmul %171, %172, %cst_66 {dimension_numbers = #tpu.dot_dimension_numbers<[1], [0], [0], [1], [0, 0, 1, 1], [], []>} : vector<2x32xbf16>, vector<32x32xbf16>, vector<2x32xf32> -> vector<2x32xf32>
    %c0_67 = arith.constant 0 : index
    %c0_68 = arith.constant 0 : index
    %174 = vector.load %arg16[%c0_67, %c0_68] : memref<1x32xf32, #tpu.memory_space<vmem>>, vector<1x32xf32>
    %175 = vector.broadcast %174 : vector<1x32xf32> to vector<2x32xf32>
    %176 = arith.addf %173, %175 : vector<2x32xf32>
    %177 = math.tanh %176 : vector<2x32xf32>
    %178 = arith.truncf %177 : vector<2x32xf32> to vector<2x32xbf16>
    %c0_69 = arith.constant 0 : index
    %c0_70 = arith.constant 0 : index
    %179 = vector.load %arg17[%c0_69, %c0_70] : memref<32x128xbf16, #tpu.memory_space<vmem>>, vector<32x128xbf16>
    %cst_71 = arith.constant dense<0.000000e+00> : vector<2x128xf32>
    %180 = tpu.matmul %178, %179, %cst_71 {dimension_numbers = #tpu.dot_dimension_numbers<[1], [0], [0], [1], [0, 0, 1, 1], [], []>} : vector<2x32xbf16>, vector<32x128xbf16>, vector<2x128xf32> -> vector<2x128xf32>
    %c0_72 = arith.constant 0 : index
    %c0_73 = arith.constant 0 : index
    %181 = vector.load %arg18[%c0_72, %c0_73] : memref<1x128xf32, #tpu.memory_space<vmem>>, vector<1x128xf32>
    %182 = vector.broadcast %181 : vector<1x128xf32> to vector<2x128xf32>
    %183 = arith.addf %180, %182 : vector<2x128xf32>
    %c0_74 = arith.constant 0 : index
    %c0_75 = arith.constant 0 : index
    %184 = vector.load %arg19[%c0_74, %c0_75] : memref<2x128xf32, #tpu.memory_space<vmem>>, vector<2x128xf32>
    tpu.vector_store %arg19[%c0_74, %c0_75], %183 {strides = array<i32>} : memref<2x128xf32, #tpu.memory_space<vmem>>, vector<2x128xf32>,
    return
  }
}

</mosaic_0001>

<llo_original>
// kernel: tpu_custom_call.1
$region0: #{tpu_custom_call.1}
  #allocation0 [shape = 'u32[]', space=smem, size = 0x4, offset = 0x4, fixed_abs, tag = 'smem constant byte address 0x4 - core index']
  #allocation1 [shape = 'u32[144,128]{1,0:T(1,128)}', space=vmem, size = 0x12000, scoped, tag = 'internal scratch']
  %s0 = inlined_call_operand.vmem [shape: f32[16,32], index: 0, kind: input, shape index: {}]
  %s1 = inlined_call_operand.hbm [shape: f32[1,32], index: 1, kind: input, shape index: {}]
  %s2 = inlined_call_operand.hbm [shape: f32[1,32], index: 2, kind: input, shape index: {}]
  %s3 = inlined_call_operand.vmem [shape: bf16[32,96], index: 3, kind: input, shape index: {}]
  %s4 = inlined_call_operand.hbm [shape: f32[1,96], index: 4, kind: input, shape index: {}]
  %s5 = inlined_call_operand.vmem [shape: bf16[32,32], index: 5, kind: input, shape index: {}]
  %s6 = inlined_call_operand.hbm [shape: f32[1,32], index: 6, kind: input, shape index: {}]
  %s7 = inlined_call_operand.hbm [shape: f32[1,32], index: 7, kind: input, shape index: {}]
  %s8 = inlined_call_operand.hbm [shape: f32[1,32], index: 8, kind: input, shape index: {}]
  %s9 = inlined_call_operand.vmem [shape: bf16[32,64], index: 9, kind: input, shape index: {}]
  %s10 = inlined_call_operand.hbm [shape: f32[1,64], index: 10, kind: input, shape index: {}]
  %s11 = inlined_call_operand.vmem [shape: bf16[64,32], index: 11, kind: input, shape index: {}]
  %s12 = inlined_call_operand.hbm [shape: f32[1,32], index: 12, kind: input, shape index: {}]
  %s13 = inlined_call_operand.hbm [shape: f32[1,32], index: 13, kind: input, shape index: {}]
  %s14 = inlined_call_operand.hbm [shape: f32[1,32], index: 14, kind: input, shape index: {}]
  %s15 = inlined_call_operand.vmem [shape: bf16[32,32], index: 15, kind: input, shape index: {}]
  %s16 = inlined_call_operand.hbm [shape: f32[1,32], index: 16, kind: input, shape index: {}]
  %s17 = inlined_call_operand.vmem [shape: bf16[32,128], index: 17, kind: input, shape index: {}]
  %s18 = inlined_call_operand.vmem [shape: f32[1,128], index: 18, kind: input, shape index: {}]
  %s19 = inlined_call_operand.hbm [shape: f32[2,128], index: 19, kind: output, shape index: {}]
  %s20 = sld [smem:[#allocation0]]
  $region130: #{tpu_custom_call.1} parent=0
    _
  %s22 = ssub.s32 1, %s20
  %s23 = scalar_select 0, %s22, %s20
  $region1: #{tpu_custom_call.1} parent=0
    #allocation2 [shape = 'u8[512]{0}', space=vmem, size = 0x400, scoped, tag = 'input window, operand 1, single buffered']
    #allocation3 [shape = 's32[1]{0}', space=sflag, size = 0x4, scoped, tag = 'scoped memory for tpu_custom_call.1']
    #allocation4 [shape = 's32[1]{0}', space=sflag, size = 0x4, scoped, tag = 'scoped memory for tpu_custom_call.1']
    #allocation5 [shape = 'u8[512]{0}', space=vmem, size = 0x400, scoped, tag = 'input window, operand 2, single buffered']
    #allocation6 [shape = 's32[1]{0}', space=sflag, size = 0x4, scoped, tag = 'scoped memory for tpu_custom_call.1']
    #allocation7 [shape = 'u8[512]{0}', space=vmem, size = 0x400, scoped, tag = 'input window, operand 4, single buffered']
    #allocation8 [shape = 'u8[512]{0}', space=vmem, size = 0x400, scoped, tag = 'input window, operand 6, single buffered']
    #allocation9 [shape = 's32[1]{0}', space=sflag, size = 0x4, scoped, tag = 'scoped memory for tpu_custom_call.1']
    #allocation10 [shape = 'u8[512]{0}', space=vmem, size = 0x400, scoped, tag = 'input window, operand 7, single buffered']
    #allocation11 [shape = 'u8[512]{0}', space=vmem, size = 0x400, scoped, tag = 'input window, operand 8, single buffered']
    #allocation12 [shape = 's32[1]{0}', space=sflag, size = 0x4, scoped, tag = 'scoped memory for tpu_custom_call.1']
    #allocation13 [shape = 'u8[512]{0}', space=vmem, size = 0x400, scoped, tag = 'input window, operand 10, single buffered']
    #allocation14 [shape = 'u8[512]{0}', space=vmem, size = 0x400, scoped, tag = 'input window, operand 12, single buffered']
    #allocation15 [shape = 's32[1]{0}', space=sflag, size = 0x4, scoped, tag = 'scoped memory for tpu_custom_call.1']
    #allocation16 [shape = 'u8[512]{0}', space=vmem, size = 0x400, scoped, tag = 'input window, operand 13, single buffered']
    #allocation17 [shape = 'u8[512]{0}', space=vmem, size = 0x400, scoped, tag = 'input window, operand 14, single buffered']
    #allocation18 [shape = 's32[1]{0}', space=sflag, size = 0x4, scoped, tag = 'scoped memory for tpu_custom_call.1']
    #allocation19 [shape = 'u8[512]{0}', space=vmem, size = 0x400, scoped, tag = 'input window, operand 16, single buffered']
    #allocation20 [shape = 'u8[1024]{0}', space=vmem, size = 0x400, scoped, tag = 'output window, operand 0, single buffered']
    %24 = vsyncpa [#allocation3], 0
    %25 = vsyncpa [#allocation6], 0
    %26 = vsyncpa [#allocation9], 0
    %27 = vsyncpa [#allocation12], 0
    %28 = vsyncpa [#allocation15], 0
    %29 = vsyncpa [#allocation18], 0
    %30 = vsyncpa [#allocation4], 0
    // Predicated region
    $region2: #{tpu_custom_call.1} parent=1 // pred_check
      _
    $region3: #{tpu_custom_call.1} parent=1 // pred_check_branch
      %32 = sbr.rel (0) target = $region5
    $region4: #{tpu_custom_call.1} parent=1 // pred_region
      _
    $region5: #{tpu_custom_call.1} parent=1 // pred_fallthru
      _
    // Predicated region
    $region6: #{tpu_custom_call.1} parent=1 // pred_check
      _
    $region7: #{tpu_custom_call.1} parent=1 // pred_check_branch
      %34 = sbr.rel (0) target = $region9
    $region8: #{tpu_custom_call.1} parent=1 // pred_region
      %s36 = ssub.s32 16, 16
      %37 = vsyncadd [#allocation3], %s36
      %s39 = sshll.u32 [#allocation2], 4
      %s40 = int_to_ptr.vmem [resolvable:$true] %s39
      %42 = dma.hbm_to_vmem [thread:$0]  %s1, 16, %s40, [#allocation3]
    $region9: #{tpu_custom_call.1} parent=1 // pred_fallthru
      _
    // Predicated region
    $region10: #{tpu_custom_call.1} parent=1 // pred_check
      _
    $region11: #{tpu_custom_call.1} parent=1 // pred_check_branch
      %44 = sbr.rel (0) target = $region13
    $region12: #{tpu_custom_call.1} parent=1 // pred_region
      %s46 = ssub.s32 16, 16
      %47 = vsyncadd [#allocation6], %s46
      %s49 = sshll.u32 [#allocation5], 4
      %s50 = int_to_ptr.vmem [resolvable:$true] %s49
      %52 = dma.hbm_to_vmem [thread:$0]  %s2, 16, %s50, [#allocation6]
    $region13: #{tpu_custom_call.1} parent=1 // pred_fallthru
      _
    // Predicated region
    $region14: #{tpu_custom_call.1} parent=1 // pred_check
      _
    $region15: #{tpu_custom_call.1} parent=1 // pred_check_branch
      %54 = sbr.rel (0) target = $region17
    $region16: #{tpu_custom_call.1} parent=1 // pred_region
      _
    $region17: #{tpu_custom_call.1} parent=1 // pred_fallthru
      _
    // Predicated region
    $region18: #{tpu_custom_call.1} parent=1 // pred_check
      _
    $region19: #{tpu_custom_call.1} parent=1 // pred_check_branch
      %56 = sbr.rel (0) target = $region21
    $region20: #{tpu_custom_call.1} parent=1 // pred_region
      %s58 = ssub.s32 16, 16
      %59 = vsyncadd [#allocation6], %s58
      %s61 = sshll.u32 [#allocation7], 4
      %s62 = int_to_ptr.vmem [resolvable:$true] %s61
      %64 = dma.hbm_to_vmem [thread:$0]  %s4, 16, %s62, [#allocation6]
    $region21: #{tpu_custom_call.1} parent=1 // pred_fallthru
      _
    // Predicated region
    $region22: #{tpu_custom_call.1} parent=1 // pred_check
      _
    $region23: #{tpu_custom_call.1} parent=1 // pred_check_branch
      %66 = sbr.rel (0) target = $region25
    $region24: #{tpu_custom_call.1} parent=1 // pred_region
      _
    $region25: #{tpu_custom_call.1} parent=1 // pred_fallthru
      _
    // Predicated region
    $region26: #{tpu_custom_call.1} parent=1 // pred_check
      _
    $region27: #{tpu_custom_call.1} parent=1 // pred_check_branch
      %68 = sbr.rel (0) target = $region29
    $region28: #{tpu_custom_call.1} parent=1 // pred_region
      %s70 = ssub.s32 16, 16
      %71 = vsyncadd [#allocation9], %s70
      %s73 = sshll.u32 [#allocation8], 4
      %s74 = int_to_ptr.vmem [resolvable:$true] %s73
      %76 = dma.hbm_to_vmem [thread:$0]  %s6, 16, %s74, [#allocation9]
    $region29: #{tpu_custom_call.1} parent=1 // pred_fallthru
      _
    // Predicated region
    $region30: #{tpu_custom_call.1} parent=1 // pred_check
      _
    $region31: #{tpu_custom_call.1} parent=1 // pred_check_branch
      %78 = sbr.rel (0) target = $region33
    $region32: #{tpu_custom_call.1} parent=1 // pred_region
      %s80 = ssub.s32 16, 16
      %81 = vsyncadd [#allocation9], %s80
      %s83 = sshll.u32 [#allocation10], 4
      %s84 = int_to_ptr.vmem [resolvable:$true] %s83
      %86 = dma.hbm_to_vmem [thread:$0]  %s7, 16, %s84, [#allocation9]
    $region33: #{tpu_custom_call.1} parent=1 // pred_fallthru
      _
    // Predicated region
    $region34: #{tpu_custom_call.1} parent=1 // pred_check
      _
    $region35: #{tpu_custom_call.1} parent=1 // pred_check_branch
      %88 = sbr.rel (0) target = $region37
    $region36: #{tpu_custom_call.1} parent=1 // pred_region
      %s90 = ssub.s32 16, 16
      %91 = vsyncadd [#allocation12], %s90
      %s93 = sshll.u32 [#allocation11], 4
      %s94 = int_to_ptr.vmem [resolvable:$true] %s93
      %96 = dma.hbm_to_vmem [thread:$0]  %s8, 16, %s94, [#allocation12]
    $region37: #{tpu_custom_call.1} parent=1 // pred_fallthru
      _
    // Predicated region
    $region38: #{tpu_custom_call.1} parent=1 // pred_check
      _
    $region39: #{tpu_custom_call.1} parent=1 // pred_check_branch
      %98 = sbr.rel (0) target = $region41
    $region40: #{tpu_custom_call.1} parent=1 // pred_region
      _
    $region41: #{tpu_custom_call.1} parent=1 // pred_fallthru
      _
    // Predicated region
    $region42: #{tpu_custom_call.1} parent=1 // pred_check
      _
    $region43: #{tpu_custom_call.1} parent=1 // pred_check_branch
      %100 = sbr.rel (0) target = $region45
    $region44: #{tpu_custom_call.1} parent=1 // pred_region
      %s102 = ssub.s32 16, 16
      %103 = vsyncadd [#allocation12], %s102
      %s105 = sshll.u32 [#allocation13], 4
      %s106 = int_to_ptr.vmem [resolvable:$true] %s105
      %108 = dma.hbm_to_vmem [thread:$0]  %s10, 16, %s106, [#allocation12]
    $region45: #{tpu_custom_call.1} parent=1 // pred_fallthru
      _
    // Predicated region
    $region46: #{tpu_custom_call.1} parent=1 // pred_check
      _
    $region47: #{tpu_custom_call.1} parent=1 // pred_check_branch
      %110 = sbr.rel (0) target = $region49
    $region48: #{tpu_custom_call.1} parent=1 // pred_region
      _
    $region49: #{tpu_custom_call.1} parent=1 // pred_fallthru
      _
    // Predicated region
    $region50: #{tpu_custom_call.1} parent=1 // pred_check
      _
    $region51: #{tpu_custom_call.1} parent=1 // pred_check_branch
      %112 = sbr.rel (0) target = $region53
    $region52: #{tpu_custom_call.1} parent=1 // pred_region
      %s114 = ssub.s32 16, 16
      %115 = vsyncadd [#allocation15], %s114
      %s117 = sshll.u32 [#allocation14], 4
      %s118 = int_to_ptr.vmem [resolvable:$true] %s117
      %120 = dma.hbm_to_vmem [thread:$0]  %s12, 16, %s118, [#allocation15]
    $region53: #{tpu_custom_call.1} parent=1 // pred_fallthru
      _
    // Predicated region
    $region54: #{tpu_custom_call.1} parent=1 // pred_check
      _
    $region55: #{tpu_custom_call.1} parent=1 // pred_check_branch
      %122 = sbr.rel (0) target = $region57
    $region56: #{tpu_custom_call.1} parent=1 // pred_region
      %s124 = ssub.s32 16, 16
      %125 = vsyncadd [#allocation15], %s124
      %s127 = sshll.u32 [#allocation16], 4
      %s128 = int_to_ptr.vmem [resolvable:$true] %s127
      %130 = dma.hbm_to_vmem [thread:$0]  %s13, 16, %s128, [#allocation15]
    $region57: #{tpu_custom_call.1} parent=1 // pred_fallthru
      _
    // Predicated region
    $region58: #{tpu_custom_call.1} parent=1 // pred_check
      _
    $region59: #{tpu_custom_call.1} parent=1 // pred_check_branch
      %132 = sbr.rel (0) target = $region61
    $region60: #{tpu_custom_call.1} parent=1 // pred_region
      %s134 = ssub.s32 16, 16
      %135 = vsyncadd [#allocation18], %s134
      %s137 = sshll.u32 [#allocation17], 4
      %s138 = int_to_ptr.vmem [resolvable:$true] %s137
      %140 = dma.hbm_to_vmem [thread:$0]  %s14, 16, %s138, [#allocation18]
    $region61: #{tpu_custom_call.1} parent=1 // pred_fallthru
      _
    // Predicated region
    $region62: #{tpu_custom_call.1} parent=1 // pred_check
      _
    $region63: #{tpu_custom_call.1} parent=1 // pred_check_branch
      %142 = sbr.rel (0) target = $region65
    $region64: #{tpu_custom_call.1} parent=1 // pred_region
      _
    $region65: #{tpu_custom_call.1} parent=1 // pred_fallthru
      _
    // Predicated region
    $region66: #{tpu_custom_call.1} parent=1 // pred_check
      _
    $region67: #{tpu_custom_call.1} parent=1 // pred_check_branch
      %144 = sbr.rel (0) target = $region69
    $region68: #{tpu_custom_call.1} parent=1 // pred_region
      %s146 = ssub.s32 16, 16
      %147 = vsyncadd [#allocation18], %s146
      %s149 = sshll.u32 [#allocation19], 4
      %s150 = int_to_ptr.vmem [resolvable:$true] %s149
      %152 = dma.hbm_to_vmem [thread:$0]  %s16, 16, %s150, [#allocation18]
    $region69: #{tpu_custom_call.1} parent=1 // pred_fallthru
      _
    // Predicated region
    $region70: #{tpu_custom_call.1} parent=1 // pred_check
      _
    $region71: #{tpu_custom_call.1} parent=1 // pred_check_branch
      %154 = sbr.rel (0) target = $region73
    $region72: #{tpu_custom_call.1} parent=1 // pred_region
      _
    $region73: #{tpu_custom_call.1} parent=1 // pred_fallthru
      _
    // Predicated region
    $region74: #{tpu_custom_call.1} parent=1 // pred_check
      _
    $region75: #{tpu_custom_call.1} parent=1 // pred_check_branch
      %156 = sbr.rel (0) target = $region77
    $region76: #{tpu_custom_call.1} parent=1 // pred_region
      _
    $region77: #{tpu_custom_call.1} parent=1 // pred_fallthru
      _
    // Predicated region
    $region78: #{tpu_custom_call.1} parent=1 // pred_check
      _
    $region79: #{tpu_custom_call.1} parent=1 // pred_check_branch
      %158 = sbr.rel (0) target = $region81
    $region80: #{tpu_custom_call.1} parent=1 // pred_region
      %159 = dma.done [#allocation3], 16
    $region81: #{tpu_custom_call.1} parent=1 // pred_fallthru
      _
    // Predicated region
    $region82: #{tpu_custom_call.1} parent=1 // pred_check
      _
    $region83: #{tpu_custom_call.1} parent=1 // pred_check_branch
      %161 = sbr.rel (0) target = $region85
    $region84: #{tpu_custom_call.1} parent=1 // pred_region
      %162 = dma.done [#allocation6], 16
    $region85: #{tpu_custom_call.1} parent=1 // pred_fallthru
      _
    // Predicated region
    $region86: #{tpu_custom_call.1} parent=1 // pred_check
      _
    $region87: #{tpu_custom_call.1} parent=1 // pred_check_branch
      %164 = sbr.rel (0) target = $region89
    $region88: #{tpu_custom_call.1} parent=1 // pred_region
      %165 = dma.done [#allocation6], 16
    $region89: #{tpu_custom_call.1} parent=1 // pred_fallthru
      _
    // Predicated region
    $region90: #{tpu_custom_call.1} parent=1 // pred_check
      _
    $region91: #{tpu_custom_call.1} parent=1 // pred_check_branch
      %167 = sbr.rel (0) target = $region93
    $region92: #{tpu_custom_call.1} parent=1 // pred_region
      %168 = dma.done [#allocation9], 16
    $region93: #{tpu_custom_call.1} parent=1 // pred_fallthru
      _
    // Predicated region
    $region94: #{tpu_custom_call.1} parent=1 // pred_check
      _
    $region95: #{tpu_custom_call.1} parent=1 // pred_check_branch
      %170 = sbr.rel (0) target = $region97
    $region96: #{tpu_custom_call.1} parent=1 // pred_region
      %171 = dma.done [#allocation9], 16
    $region97: #{tpu_custom_call.1} parent=1 // pred_fallthru
      _
    // Predicated region
    $region98: #{tpu_custom_call.1} parent=1 // pred_check
      _
    $region99: #{tpu_custom_call.1} parent=1 // pred_check_branch
      %173 = sbr.rel (0) target = $region101
    $region100: #{tpu_custom_call.1} parent=1 // pred_region
      %174 = dma.done [#allocation12], 16
    $region101: #{tpu_custom_call.1} parent=1 // pred_fallthru
      _
    // Predicated region
    $region102: #{tpu_custom_call.1} parent=1 // pred_check
      _
    $region103: #{tpu_custom_call.1} parent=1 // pred_check_branch
      %176 = sbr.rel (0) target = $region105
    $region104: #{tpu_custom_call.1} parent=1 // pred_region
      %177 = dma.done [#allocation12], 16
    $region105: #{tpu_custom_call.1} parent=1 // pred_fallthru
      _
    // Predicated region
    $region106: #{tpu_custom_call.1} parent=1 // pred_check
      _
    $region107: #{tpu_custom_call.1} parent=1 // pred_check_branch
      %179 = sbr.rel (0) target = $region109
    $region108: #{tpu_custom_call.1} parent=1 // pred_region
      %180 = dma.done [#allocation15], 16
    $region109: #{tpu_custom_call.1} parent=1 // pred_fallthru
      _
    // Predicated region
    $region110: #{tpu_custom_call.1} parent=1 // pred_check
      _
    $region111: #{tpu_custom_call.1} parent=1 // pred_check_branch
      %182 = sbr.rel (0) target = $region113
    $region112: #{tpu_custom_call.1} parent=1 // pred_region
      %183 = dma.done [#allocation15], 16
    $region113: #{tpu_custom_call.1} parent=1 // pred_fallthru
      _
    // Predicated region
    $region114: #{tpu_custom_call.1} parent=1 // pred_check
      _
    $region115: #{tpu_custom_call.1} parent=1 // pred_check_branch
      %185 = sbr.rel (0) target = $region117
    $region116: #{tpu_custom_call.1} parent=1 // pred_region
      %186 = dma.done [#allocation18], 16
    $region117: #{tpu_custom_call.1} parent=1 // pred_fallthru
      _
    // Predicated region
    $region118: #{tpu_custom_call.1} parent=1 // pred_check
      _
    $region119: #{tpu_custom_call.1} parent=1 // pred_check_branch
      %188 = sbr.rel (0) target = $region121
    $region120: #{tpu_custom_call.1} parent=1 // pred_region
      %189 = dma.done [#allocation18], 16
    $region121: #{tpu_custom_call.1} parent=1 // pred_fallthru
      _
    %v191 = vld [vmem:[%s0] sm:$0xff]
    %v192 = vld [vmem:[%s0 + $0x8] sm:$0xff]
    %vm193 = vcmask 261120
    %v194 = vsel %vm193, %v191, 0.0
    %195 = vadd.xlane.f32.xlu0 %v194
    %v196 = vpop.xlane.xlu0 %195
    %v197 = vsel %vm193, %v192, 0.0
    %198 = vadd.xlane.f32.xlu0 %v197
    %v199 = vpop.xlane.xlu0 %198
    %v200 = vrcp.pop 32.0
    %v201 = vmul.f32 %v196, %v200
    %v202 = vmul.f32 %v199, %v200
    %v203 = vsub.f32 %v191, %v201
    %v204 = vsub.f32 %v192, %v202
    %v205 = vmul.f32 %v203, %v203
    %v206 = vmul.f32 %v204, %v204
    %v207 = vsel %vm193, %v205, 0.0
    %208 = vadd.xlane.f32.xlu0 %v207
    %v209 = vpop.xlane.xlu0 %208
    %v210 = vsel %vm193, %v206, 0.0
    %211 = vadd.xlane.f32.xlu0 %v210
    %v212 = vpop.xlane.xlu0 %211
    %v213 = vmul.f32 %v209, %v200
    %v214 = vmul.f32 %v212, %v200
    %v215 = vadd.f32 %v213, 1e-12
    %v216 = vadd.f32 %v214, 1e-12
    %v217 = vrsqrt.pop %v215
    %v218 = vrsqrt.pop %v216
    %v219 = vmul.f32 %v203, %v217
    %v220 = vmul.f32 %v204, %v218
    %v221 = vld [vmem:[#allocation2] sm:$0x1]
    %v223 = vlaneseq
    %v224 = vshrl.u32 %v223, 7
    %v225 = vsub.s32 0, %v224
    %v226 = vrot.slane %v221, %v225
    %v228 = vmul.f32 %v219, %v226
    %v229 = vmul.f32 %v220, %v226
    %v230 = vld [vmem:[#allocation5] sm:$0x1]
    %v232 = vlaneseq
    %v233 = vshrl.u32 %v232, 7
    %v234 = vsub.s32 0, %v233
    %v235 = vrot.slane %v230, %v234
    %v237 = vadd.f32 %v228, %v235
    %v238 = vadd.f32 %v229, %v235
    %v239 = vpack.c.bf16 %v238, %v237
    %v240 = vld [vmem:[%s3] sm:$0xf]
    %v241 = vld [vmem:[%s3 + $0x4] sm:$0xf]
    %v242 = vld [vmem:[%s3 + $0x8] sm:$0xf]
    %v243 = vld [vmem:[%s3 + $0xc] sm:$0xf]
    %v244 = vld [vmem:[#allocation7] sm:$0x1]
    %v246 = vlaneseq
    %v247 = vshrl.u32 %v246, 7
    %v248 = vsub.s32 0, %v247
    %v249 = vrot.slane %v244, %v248
    %v255 = vunpack.c.l.b16 %v240
    %v256 = vunpack.c.l.b16 %v241
    %v257 = vunpack.c.l.b16 %v242
    %v258 = vunpack.c.l.b16 %v243
    %v259 = vpack.c.b16 %v256, %v255
    %v260 = vpack.c.b16 %v258, %v257
    %v264 = vsel %vm193, %v239, 0
    %266 = vmatprep.subr.bf16.mxu0 0
    %267 = vmatpush1.bf16.msra.mxu0 %v259
    %268 = vmatprep.subr.bf16.mxu0 0
    %269 = vmatpush1.bf16.msra.mxu0 %v260
    %270 = vmatprep.subr.bf16.mxu0 0
    %271 = vmatpush1.bf16.msra.mxu0 0
    %272 = vmatprep.subr.bf16.mxu0 0
    %273 = vmatpush1.bf16.msra.mxu0 0
    %274 = vmatprep.subr.bf16.mxu0 0
    %275 = vmatpush1.bf16.msra.mxu0 0
    %276 = vmatprep.subr.bf16.mxu0 0
    %277 = vmatpush1.bf16.msra.mxu0 0
    %278 = vmatprep.subr.bf16.mxu0 0
    %279 = vmatpush1.bf16.msra.mxu0 0
    %280 = vmatprep.subr.bf16.mxu0 0
    %281 = vmatpush1.bf16.msra.mxu0 0
    %282 = vmatprep.subr.bf16.mxu0 0
    %283 = vmatpush1.bf16.msra.mxu0 0
    %284 = vmatprep.subr.bf16.mxu0 0
    %285 = vmatpush1.bf16.msra.mxu0 0
    %286 = vmatprep.subr.bf16.mxu0 0
    %287 = vmatpush1.bf16.msra.mxu0 0
    %288 = vmatprep.subr.bf16.mxu0 0
    %289 = vmatpush1.bf16.msra.mxu0 0
    %290 = vmatprep.subr.bf16.mxu0 0
    %291 = vmatpush1.bf16.msra.mxu0 0
    %292 = vmatprep.subr.bf16.mxu0 0
    %293 = vmatpush1.bf16.msra.mxu0 0
    %294 = vmatprep.subr.bf16.mxu0 0
    %295 = vmatpush1.bf16.msra.mxu0 0
    %296 = vmatprep.subr.bf16.mxu0 0
    %297 = vmatpush1.bf16.msra.mxu0 0
    %298 = vmatprep.mubr.bf16.mxu0 0
    %299 = vmatmul.mubr.bf16.gmra.mrb[0].mxu0 %v264
    %v300 = vpop.f32.mrb[0].mxu0
    %v301 = vadd.f32 %v249, %v300
    %v302 = vpop.f32.mrb[0].mxu0
    %v303 = vpop.f32.mrb[0].mxu0
    %v304 = vadd.f32 %v249, %v303
    %v305 = vpop.f32.mrb[0].mxu0
    %306 = vdwg.mxu0
    %v307 = vpack.c.bf16 %v301, %v301
    %v308 = vpack.c.bf16 %v304, %v304
    %310 = vrot.lane.b32.xlu0 %v307, 96
    %v311 = vpop.permute.xlu0 %310
    %vm312 = vcmask 130048
    %v314 = vsel %vm312, %v307, 0
    %v317 = vsel %vm312, %v311, 0
    %319 = vmatprep.subr.bf16.mxu0 0
    %320 = vmatpush1.bf16.xpose.msra.mxu0 %v317
    %321 = vmatprep.subr.bf16.mxu0 0
    %322 = vmatpush1.bf16.xpose.msra.mxu0 0
    %323 = vmatprep.subr.bf16.mxu0 0
    %324 = vmatpush1.bf16.xpose.msra.mxu0 0
    %325 = vmatprep.subr.bf16.mxu0 0
    %326 = vmatpush1.bf16.xpose.msra.mxu0 0
    %327 = vmatprep.subr.bf16.mxu0 0
    %328 = vmatpush1.bf16.xpose.msra.mxu0 0
    %329 = vmatprep.subr.bf16.mxu0 0
    %330 = vmatpush1.bf16.xpose.msra.mxu0 0
    %331 = vmatprep.subr.bf16.mxu0 0
    %332 = vmatpush1.bf16.xpose.msra.mxu0 0
    %333 = vmatprep.subr.bf16.mxu0 0
    %334 = vmatpush1.bf16.xpose.msra.mxu0 0
    %335 = vmatprep.subr.bf16.mxu0 0
    %336 = vmatpush1.bf16.xpose.msra.mxu0 0
    %337 = vmatprep.subr.bf16.mxu0 0
    %338 = vmatpush1.bf16.xpose.msra.mxu0 0
    %339 = vmatprep.subr.bf16.mxu0 0
    %340 = vmatpush1.bf16.xpose.msra.mxu0 0
    %341 = vmatprep.subr.bf16.mxu0 0
    %342 = vmatpush1.bf16.xpose.msra.mxu0 0
    %343 = vmatprep.subr.bf16.mxu0 0
    %344 = vmatpush1.bf16.xpose.msra.mxu0 0
    %345 = vmatprep.subr.bf16.mxu0 0
    %346 = vmatpush1.bf16.xpose.msra.mxu0 0
    %347 = vmatprep.subr.bf16.mxu0 0
    %348 = vmatpush1.bf16.xpose.msra.mxu0 0
    %349 = vmatprep.subr.bf16.mxu0 0
    %350 = vmatpush1.bf16.xpose.msra.mxu0 0
    %351 = vmatprep.mubr.bf16.mxu0 0
    %352 = vmatmul.mubr.bf16.gmra.mrb[0].mxu0 %v314
    %v353 = vpop.f32.mrb[0].mxu0
    %v354 = vadd.f32 0.0, %v353
    %v355 = vpop.f32.mrb[0].mxu0
    %v356 = vpop.f32.mrb[0].mxu0
    %v357 = vpop.f32.mrb[0].mxu0
    %358 = vdwg.mxu0
    %360 = vrot.lane.b32.xlu0 %v308, 96
    %v361 = vpop.permute.xlu0 %360
    %v363 = vsel %vm312, %v308, 0
    %v366 = vsel %vm312, %v361, 0
    %368 = vmatprep.subr.bf16.mxu0 0
    %369 = vmatpush1.bf16.xpose.msra.mxu0 %v366
    %370 = vmatprep.subr.bf16.mxu0 0
    %371 = vmatpush1.bf16.xpose.msra.mxu0 0
    %372 = vmatprep.subr.bf16.mxu0 0
    %373 = vmatpush1.bf16.xpose.msra.mxu0 0
    %374 = vmatprep.subr.bf16.mxu0 0
    %375 = vmatpush1.bf16.xpose.msra.mxu0 0
    %376 = vmatprep.subr.bf16.mxu0 0
    %377 = vmatpush1.bf16.xpose.msra.mxu0 0
    %378 = vmatprep.subr.bf16.mxu0 0
    %379 = vmatpush1.bf16.xpose.msra.mxu0 0
    %380 = vmatprep.subr.bf16.mxu0 0
    %381 = vmatpush1.bf16.xpose.msra.mxu0 0
    %382 = vmatprep.subr.bf16.mxu0 0
    %383 = vmatpush1.bf16.xpose.msra.mxu0 0
    %384 = vmatprep.subr.bf16.mxu0 0
    %385 = vmatpush1.bf16.xpose.msra.mxu0 0
    %386 = vmatprep.subr.bf16.mxu0 0
    %387 = vmatpush1.bf16.xpose.msra.mxu0 0
    %388 = vmatprep.subr.bf16.mxu0 0
    %389 = vmatpush1.bf16.xpose.msra.mxu0 0
    %390 = vmatprep.subr.bf16.mxu0 0
    %391 = vmatpush1.bf16.xpose.msra.mxu0 0
    %392 = vmatprep.subr.bf16.mxu0 0
    %393 = vmatpush1.bf16.xpose.msra.mxu0 0
    %394 = vmatprep.subr.bf16.mxu0 0
    %395 = vmatpush1.bf16.xpose.msra.mxu0 0
    %396 = vmatprep.subr.bf16.mxu0 0
    %397 = vmatpush1.bf16.xpose.msra.mxu0 0
    %398 = vmatprep.subr.bf16.mxu0 0
    %399 = vmatpush1.bf16.xpose.msra.mxu0 0
    %400 = vmatprep.mubr.bf16.mxu0 0
    %401 = vmatmul.mubr.bf16.gmra.mrb[0].mxu0 %v363
    %v402 = vpop.f32.mrb[0].mxu0
    %v403 = vadd.f32 0.0, %v402
    %v404 = vpop.f32.mrb[0].mxu0
    %v405 = vpop.f32.mrb[0].mxu0
    %v406 = vpop.f32.mrb[0].mxu0
    %407 = vdwg.mxu0
    %v408 = vmul.f32 %v354, 0.25
    %v409 = vmul.f32 %v403, 0.25
    %vm410 = vcmask 64512
    %v411 = vsel %vm410, %v408, -inf
    %412 = vmax.xlane.f32.xlu0 %v411
    %v413 = vpop.xlane.xlu0 %412
    %v414 = vsel %vm410, %v409, -inf
    %415 = vmax.xlane.f32.xlu0 %v414
    %v416 = vpop.xlane.xlu0 %415
    %v417 = vsub.f32 %v408, %v413
    %v418 = vsub.f32 %v409, %v416
    %v419 = vmul.f32 %v417, 1.442695
    %v420 = vpow.pop %v419
    %v421 = vmul.f32 %v418, 1.442695
    %v422 = vpow.pop %v421
    %v423 = vsel %vm410, %v420, 0.0
    %424 = vadd.xlane.f32.xlu0 %v423
    %v425 = vpop.xlane.xlu0 %424
    %v426 = vsel %vm410, %v422, 0.0
    %427 = vadd.xlane.f32.xlu0 %v426
    %v428 = vpop.xlane.xlu0 %427
    %v429 = vrcp.pop %v425
    %v430 = vrcp.pop %v428
    %v431 = vmul.f32 %v420, %v429
    %v432 = vmul.f32 %v422, %v430
    %v433 = vpack.c.bf16 %v431, %v431
    %v434 = vpack.c.bf16 %v432, %v432
    %435 = vrot.lane.b32.xlu0 %v307, 64
    %v436 = vpop.permute.xlu0 %435
    %v438 = vsel %vm410, %v433, 0
    %vm440 = vcmask 1043456
    %v442 = vsel %vm440, %v436, 0
    %444 = vmatprep.subr.bf16.mxu0 0
    %445 = vmatpush1.bf16.msra.mxu0 %v442
    %446 = vmatprep.subr.bf16.mxu0 0
    %447 = vmatpush1.bf16.msra.mxu0 0
    %448 = vmatprep.subr.bf16.mxu0 0
    %449 = vmatpush1.bf16.msra.mxu0 0
    %450 = vmatprep.subr.bf16.mxu0 0
    %451 = vmatpush1.bf16.msra.mxu0 0
    %452 = vmatprep.subr.bf16.mxu0 0
    %453 = vmatpush1.bf16.msra.mxu0 0
    %454 = vmatprep.subr.bf16.mxu0 0
    %455 = vmatpush1.bf16.msra.mxu0 0
    %456 = vmatprep.subr.bf16.mxu0 0
    %457 = vmatpush1.bf16.msra.mxu0 0
    %458 = vmatprep.subr.bf16.mxu0 0
    %459 = vmatpush1.bf16.msra.mxu0 0
    %460 = vmatprep.subr.bf16.mxu0 0
    %461 = vmatpush1.bf16.msra.mxu0 0
    %462 = vmatprep.subr.bf16.mxu0 0
    %463 = vmatpush1.bf16.msra.mxu0 0
    %464 = vmatprep.subr.bf16.mxu0 0
    %465 = vmatpush1.bf16.msra.mxu0 0
    %466 = vmatprep.subr.bf16.mxu0 0
    %467 = vmatpush1.bf16.msra.mxu0 0
    %468 = vmatprep.subr.bf16.mxu0 0
    %469 = vmatpush1.bf16.msra.mxu0 0
    %470 = vmatprep.subr.bf16.mxu0 0
    %471 = vmatpush1.bf16.msra.mxu0 0
    %472 = vmatprep.subr.bf16.mxu0 0
    %473 = vmatpush1.bf16.msra.mxu0 0
    %474 = vmatprep.subr.bf16.mxu0 0
    %475 = vmatpush1.bf16.msra.mxu0 0
    %476 = vmatprep.mubr.bf16.mxu0 0
    %477 = vmatmul.mubr.bf16.gmra.mrb[0].mxu0 %v438
    %v478 = vpop.f32.mrb[0].mxu0
    %v479 = vadd.f32 0.0, %v478
    %v480 = vpop.f32.mrb[0].mxu0
    %v481 = vpop.f32.mrb[0].mxu0
    %v482 = vpop.f32.mrb[0].mxu0
    %483 = vdwg.mxu0
    %484 = vrot.lane.b32.xlu0 %v308, 64
    %v485 = vpop.permute.xlu0 %484
    %v487 = vsel %vm410, %v434, 0
    %v490 = vsel %vm440, %v485, 0
    %492 = vmatprep.subr.bf16.mxu0 0
    %493 = vmatpush1.bf16.msra.mxu0 %v490
    %494 = vmatprep.subr.bf16.mxu0 0
    %495 = vmatpush1.bf16.msra.mxu0 0
    %496 = vmatprep.subr.bf16.mxu0 0
    %497 = vmatpush1.bf16.msra.mxu0 0
    %498 = vmatprep.subr.bf16.mxu0 0
    %499 = vmatpush1.bf16.msra.mxu0 0
    %500 = vmatprep.subr.bf16.mxu0 0
    %501 = vmatpush1.bf16.msra.mxu0 0
    %502 = vmatprep.subr.bf16.mxu0 0
    %503 = vmatpush1.bf16.msra.mxu0 0
    %504 = vmatprep.subr.bf16.mxu0 0
    %505 = vmatpush1.bf16.msra.mxu0 0
    %506 = vmatprep.subr.bf16.mxu0 0
    %507 = vmatpush1.bf16.msra.mxu0 0
    %508 = vmatprep.subr.bf16.mxu0 0
    %509 = vmatpush1.bf16.msra.mxu0 0
    %510 = vmatprep.subr.bf16.mxu0 0
    %511 = vmatpush1.bf16.msra.mxu0 0
    %512 = vmatprep.subr.bf16.mxu0 0
    %513 = vmatpush1.bf16.msra.mxu0 0
    %514 = vmatprep.subr.bf16.mxu0 0
    %515 = vmatpush1.bf16.msra.mxu0 0
    %516 = vmatprep.subr.bf16.mxu0 0
    %517 = vmatpush1.bf16.msra.mxu0 0
    %518 = vmatprep.subr.bf16.mxu0 0
    %519 = vmatpush1.bf16.msra.mxu0 0
    %520 = vmatprep.subr.bf16.mxu0 0
    %521 = vmatpush1.bf16.msra.mxu0 0
    %522 = vmatprep.subr.bf16.mxu0 0
    %523 = vmatpush1.bf16.msra.mxu0 0
    %524 = vmatprep.mubr.bf16.mxu0 0
    %525 = vmatmul.mubr.bf16.gmra.mrb[0].mxu0 %v487
    %v526 = vpop.f32.mrb[0].mxu0
    %v527 = vadd.f32 0.0, %v526
    %v528 = vpop.f32.mrb[0].mxu0
    %v529 = vpop.f32.mrb[0].mxu0
    %v530 = vpop.f32.mrb[0].mxu0
    %531 = vdwg.mxu0
    %v532 = vpack.c.bf16 %v527, %v479
    %v533 = vld [vmem:[%s5] sm:$0xf]
    %v534 = vld [vmem:[%s5 + $0x4] sm:$0xf]
    %535 = vrot.lane.b32.xlu0 %v307, 112
    %v536 = vpop.permute.xlu0 %535
    %537 = vrot.lane.b32.xlu0 %v307, 80
    %v538 = vpop.permute.xlu0 %537
    %v540 = vsel %vm312, %v536, 0
    %v543 = vsel %vm312, %v538, 0
    %545 = vmatprep.subr.bf16.mxu0 0
    %546 = vmatpush1.bf16.xpose.msra.mxu0 %v543
    %547 = vmatprep.subr.bf16.mxu0 0
    %548 = vmatpush1.bf16.xpose.msra.mxu0 0
    %549 = vmatprep.subr.bf16.mxu0 0
    %550 = vmatpush1.bf16.xpose.msra.mxu0 0
    %551 = vmatprep.subr.bf16.mxu0 0
    %552 = vmatpush1.bf16.xpose.msra.mxu0 0
    %553 = vmatprep.subr.bf16.mxu0 0
    %554 = vmatpush1.bf16.xpose.msra.mxu0 0
    %555 = vmatprep.subr.bf16.mxu0 0
    %556 = vmatpush1.bf16.xpose.msra.mxu0 0
    %557 = vmatprep.subr.bf16.mxu0 0
    %558 = vmatpush1.bf16.xpose.msra.mxu0 0
    %559 = vmatprep.subr.bf16.mxu0 0
    %560 = vmatpush1.bf16.xpose.msra.mxu0 0
    %561 = vmatprep.subr.bf16.mxu0 0
    %562 = vmatpush1.bf16.xpose.msra.mxu0 0
    %563 = vmatprep.subr.bf16.mxu0 0
    %564 = vmatpush1.bf16.xpose.msra.mxu0 0
    %565 = vmatprep.subr.bf16.mxu0 0
    %566 = vmatpush1.bf16.xpose.msra.mxu0 0
    %567 = vmatprep.subr.bf16.mxu0 0
    %568 = vmatpush1.bf16.xpose.msra.mxu0 0
    %569 = vmatprep.subr.bf16.mxu0 0
    %570 = vmatpush1.bf16.xpose.msra.mxu0 0
    %571 = vmatprep.subr.bf16.mxu0 0
    %572 = vmatpush1.bf16.xpose.msra.mxu0 0
    %573 = vmatprep.subr.bf16.mxu0 0
    %574 = vmatpush1.bf16.xpose.msra.mxu0 0
    %575 = vmatprep.subr.bf16.mxu0 0
    %576 = vmatpush1.bf16.xpose.msra.mxu0 0
    %577 = vmatprep.mubr.bf16.mxu0 0
    %578 = vmatmul.mubr.bf16.gmra.mrb[0].mxu0 %v540
    %v579 = vpop.f32.mrb[0].mxu0
    %v580 = vadd.f32 0.0, %v579
    %v581 = vpop.f32.mrb[0].mxu0
    %v582 = vpop.f32.mrb[0].mxu0
    %v583 = vpop.f32.mrb[0].mxu0
    %584 = vdwg.mxu0
    %585 = vrot.lane.b32.xlu0 %v308, 112
    %v586 = vpop.permute.xlu0 %585
    %587 = vrot.lane.b32.xlu0 %v308, 80
    %v588 = vpop.permute.xlu0 %587
    %v590 = vsel %vm312, %v586, 0
    %v593 = vsel %vm312, %v588, 0
    %595 = vmatprep.subr.bf16.mxu0 0
    %596 = vmatpush1.bf16.xpose.msra.mxu0 %v593
    %597 = vmatprep.subr.bf16.mxu0 0
    %598 = vmatpush1.bf16.xpose.msra.mxu0 0
    %599 = vmatprep.subr.bf16.mxu0 0
    %600 = vmatpush1.bf16.xpose.msra.mxu0 0
    %601 = vmatprep.subr.bf16.mxu0 0
    %602 = vmatpush1.bf16.xpose.msra.mxu0 0
    %603 = vmatprep.subr.bf16.mxu0 0
    %604 = vmatpush1.bf16.xpose.msra.mxu0 0
    %605 = vmatprep.subr.bf16.mxu0 0
    %606 = vmatpush1.bf16.xpose.msra.mxu0 0
    %607 = vmatprep.subr.bf16.mxu0 0
    %608 = vmatpush1.bf16.xpose.msra.mxu0 0
    %609 = vmatprep.subr.bf16.mxu0 0
    %610 = vmatpush1.bf16.xpose.msra.mxu0 0
    %611 = vmatprep.subr.bf16.mxu0 0
    %612 = vmatpush1.bf16.xpose.msra.mxu0 0
    %613 = vmatprep.subr.bf16.mxu0 0
    %614 = vmatpush1.bf16.xpose.msra.mxu0 0
    %615 = vmatprep.subr.bf16.mxu0 0
    %616 = vmatpush1.bf16.xpose.msra.mxu0 0
    %617 = vmatprep.subr.bf16.mxu0 0
    %618 = vmatpush1.bf16.xpose.msra.mxu0 0
    %619 = vmatprep.subr.bf16.mxu0 0
    %620 = vmatpush1.bf16.xpose.msra.mxu0 0
    %621 = vmatprep.subr.bf16.mxu0 0
    %622 = vmatpush1.bf16.xpose.msra.mxu0 0
    %623 = vmatprep.subr.bf16.mxu0 0
    %624 = vmatpush1.bf16.xpose.msra.mxu0 0
    %625 = vmatprep.subr.bf16.mxu0 0
    %626 = vmatpush1.bf16.xpose.msra.mxu0 0
    %627 = vmatprep.mubr.bf16.mxu0 0
    %628 = vmatmul.mubr.bf16.gmra.mrb[0].mxu0 %v590
    %v629 = vpop.f32.mrb[0].mxu0
    %v630 = vadd.f32 0.0, %v629
    %v631 = vpop.f32.mrb[0].mxu0
    %v632 = vpop.f32.mrb[0].mxu0
    %v633 = vpop.f32.mrb[0].mxu0
    %634 = vdwg.mxu0
    %v635 = vmul.f32 %v580, 0.25
    %v636 = vmul.f32 %v630, 0.25
    %v637 = vsel %vm410, %v635, -inf
    %638 = vmax.xlane.f32.xlu0 %v637
    %v639 = vpop.xlane.xlu0 %638
    %v640 = vsel %vm410, %v636, -inf
    %641 = vmax.xlane.f32.xlu0 %v640
    %v642 = vpop.xlane.xlu0 %641
    %v643 = vsub.f32 %v635, %v639
    %v644 = vsub.f32 %v636, %v642
    %v645 = vmul.f32 %v643, 1.442695
    %v646 = vpow.pop %v645
    %v647 = vmul.f32 %v644, 1.442695
    %v648 = vpow.pop %v647
    %v649 = vsel %vm410, %v646, 0.0
    %650 = vadd.xlane.f32.xlu0 %v649
    %v651 = vpop.xlane.xlu0 %650
    %v652 = vsel %vm410, %v648, 0.0
    %653 = vadd.xlane.f32.xlu0 %v652
    %v654 = vpop.xlane.xlu0 %653
    %v655 = vrcp.pop %v651
    %v656 = vrcp.pop %v654
    %v657 = vmul.f32 %v646, %v655
    %v658 = vmul.f32 %v648, %v656
    %v659 = vpack.c.bf16 %v657, %v657
    %v660 = vpack.c.bf16 %v658, %v658
    %661 = vrot.lane.b32.xlu0 %v307, 48
    %v662 = vpop.permute.xlu0 %661
    %v664 = vsel %vm410, %v659, 0
    %v667 = vsel %vm440, %v662, 0
    %669 = vmatprep.subr.bf16.mxu0 0
    %670 = vmatpush1.bf16.msra.mxu0 %v667
    %671 = vmatprep.subr.bf16.mxu0 0
    %672 = vmatpush1.bf16.msra.mxu0 0
    %673 = vmatprep.subr.bf16.mxu0 0
    %674 = vmatpush1.bf16.msra.mxu0 0
    %675 = vmatprep.subr.bf16.mxu0 0
    %676 = vmatpush1.bf16.msra.mxu0 0
    %677 = vmatprep.subr.bf16.mxu0 0
    %678 = vmatpush1.bf16.msra.mxu0 0
    %679 = vmatprep.subr.bf16.mxu0 0
    %680 = vmatpush1.bf16.msra.mxu0 0
    %681 = vmatprep.subr.bf16.mxu0 0
    %682 = vmatpush1.bf16.msra.mxu0 0
    %683 = vmatprep.subr.bf16.mxu0 0
    %684 = vmatpush1.bf16.msra.mxu0 0
    %685 = vmatprep.subr.bf16.mxu0 0
    %686 = vmatpush1.bf16.msra.mxu0 0
    %687 = vmatprep.subr.bf16.mxu0 0
    %688 = vmatpush1.bf16.msra.mxu0 0
    %689 = vmatprep.subr.bf16.mxu0 0
    %690 = vmatpush1.bf16.msra.mxu0 0
    %691 = vmatprep.subr.bf16.mxu0 0
    %692 = vmatpush1.bf16.msra.mxu0 0
    %693 = vmatprep.subr.bf16.mxu0 0
    %694 = vmatpush1.bf16.msra.mxu0 0
    %695 = vmatprep.subr.bf16.mxu0 0
    %696 = vmatpush1.bf16.msra.mxu0 0
    %697 = vmatprep.subr.bf16.mxu0 0
    %698 = vmatpush1.bf16.msra.mxu0 0
    %699 = vmatprep.subr.bf16.mxu0 0
    %700 = vmatpush1.bf16.msra.mxu0 0
    %701 = vmatprep.mubr.bf16.mxu0 0
    %702 = vmatmul.mubr.bf16.gmra.mrb[0].mxu0 %v664
    %v703 = vpop.f32.mrb[0].mxu0
    %v704 = vadd.f32 0.0, %v703
    %v705 = vpop.f32.mrb[0].mxu0
    %v706 = vpop.f32.mrb[0].mxu0
    %v707 = vpop.f32.mrb[0].mxu0
    %708 = vdwg.mxu0
    %709 = vrot.lane.b32.xlu0 %v308, 48
    %v710 = vpop.permute.xlu0 %709
    %v712 = vsel %vm410, %v660, 0
    %v715 = vsel %vm440, %v710, 0
    %717 = vmatprep.subr.bf16.mxu0 0
    %718 = vmatpush1.bf16.msra.mxu0 %v715
    %719 = vmatprep.subr.bf16.mxu0 0
    %720 = vmatpush1.bf16.msra.mxu0 0
    %721 = vmatprep.subr.bf16.mxu0 0
    %722 = vmatpush1.bf16.msra.mxu0 0
    %723 = vmatprep.subr.bf16.mxu0 0
    %724 = vmatpush1.bf16.msra.mxu0 0
    %725 = vmatprep.subr.bf16.mxu0 0
    %726 = vmatpush1.bf16.msra.mxu0 0
    %727 = vmatprep.subr.bf16.mxu0 0
    %728 = vmatpush1.bf16.msra.mxu0 0
    %729 = vmatprep.subr.bf16.mxu0 0
    %730 = vmatpush1.bf16.msra.mxu0 0
    %731 = vmatprep.subr.bf16.mxu0 0
    %732 = vmatpush1.bf16.msra.mxu0 0
    %733 = vmatprep.subr.bf16.mxu0 0
    %734 = vmatpush1.bf16.msra.mxu0 0
    %735 = vmatprep.subr.bf16.mxu0 0
    %736 = vmatpush1.bf16.msra.mxu0 0
    %737 = vmatprep.subr.bf16.mxu0 0
    %738 = vmatpush1.bf16.msra.mxu0 0
    %739 = vmatprep.subr.bf16.mxu0 0
    %740 = vmatpush1.bf16.msra.mxu0 0
    %741 = vmatprep.subr.bf16.mxu0 0
    %742 = vmatpush1.bf16.msra.mxu0 0
    %743 = vmatprep.subr.bf16.mxu0 0
    %744 = vmatpush1.bf16.msra.mxu0 0
    %745 = vmatprep.subr.bf16.mxu0 0
    %746 = vmatpush1.bf16.msra.mxu0 0
    %747 = vmatprep.subr.bf16.mxu0 0
    %748 = vmatpush1.bf16.msra.mxu0 0
    %749 = vmatprep.mubr.bf16.mxu0 0
    %750 = vmatmul.mubr.bf16.gmra.mrb[0].mxu0 %v712
    %v751 = vpop.f32.mrb[0].mxu0
    %v752 = vadd.f32 0.0, %v751
    %v753 = vpop.f32.mrb[0].mxu0
    %v754 = vpop.f32.mrb[0].mxu0
    %v755 = vpop.f32.mrb[0].mxu0
    %756 = vdwg.mxu0
    %v757 = vpack.c.bf16 %v752, %v704
    %v758 = vld [vmem:[%s5 + $0x8] sm:$0xf]
    %v759 = vld [vmem:[%s5 + $0xc] sm:$0xf]
    %v762 = vunpack.c.l.b16 %v758
    %v763 = vunpack.c.l.b16 %v759
    %v764 = vpack.c.b16 %v763, %v762
    %v767 = vsel %vm312, %v757, 0
    %769 = vmatprep.subr.bf16.mxu0 0
    %770 = vmatpush1.bf16.msra.mxu0 %v764
    %771 = vmatprep.subr.bf16.mxu0 0
    %772 = vmatpush1.bf16.msra.mxu0 0
    %773 = vmatprep.subr.bf16.mxu0 0
    %774 = vmatpush1.bf16.msra.mxu0 0
    %775 = vmatprep.subr.bf16.mxu0 0
    %776 = vmatpush1.bf16.msra.mxu0 0
    %777 = vmatprep.subr.bf16.mxu0 0
    %778 = vmatpush1.bf16.msra.mxu0 0
    %779 = vmatprep.subr.bf16.mxu0 0
    %780 = vmatpush1.bf16.msra.mxu0 0
    %781 = vmatprep.subr.bf16.mxu0 0
    %782 = vmatpush1.bf16.msra.mxu0 0
    %783 = vmatprep.subr.bf16.mxu0 0
    %784 = vmatpush1.bf16.msra.mxu0 0
    %785 = vmatprep.subr.bf16.mxu0 0
    %786 = vmatpush1.bf16.msra.mxu0 0
    %787 = vmatprep.subr.bf16.mxu0 0
    %788 = vmatpush1.bf16.msra.mxu0 0
    %789 = vmatprep.subr.bf16.mxu0 0
    %790 = vmatpush1.bf16.msra.mxu0 0
    %791 = vmatprep.subr.bf16.mxu0 0
    %792 = vmatpush1.bf16.msra.mxu0 0
    %793 = vmatprep.subr.bf16.mxu0 0
    %794 = vmatpush1.bf16.msra.mxu0 0
    %795 = vmatprep.subr.bf16.mxu0 0
    %796 = vmatpush1.bf16.msra.mxu0 0
    %797 = vmatprep.subr.bf16.mxu0 0
    %798 = vmatpush1.bf16.msra.mxu0 0
    %799 = vmatprep.subr.bf16.mxu0 0
    %800 = vmatpush1.bf16.msra.mxu0 0
    %801 = vmatprep.mubr.bf16.mxu0 0
    %802 = vmatmul.mubr.bf16.gmra.mrb[0].mxu0 %v767
    %v803 = vpop.f32.mrb[0].mxu0
    %v804 = vadd.f32 0.0, %v803
    %v805 = vpop.f32.mrb[0].mxu0
    %v806 = vpop.f32.mrb[0].mxu0
    %v807 = vadd.f32 0.0, %v806
    %v808 = vpop.f32.mrb[0].mxu0
    %809 = vdwg.mxu0
    %v812 = vunpack.c.l.b16 %v533
    %v813 = vunpack.c.l.b16 %v534
    %v814 = vpack.c.b16 %v813, %v812
    %v817 = vsel %vm312, %v532, 0
    %819 = vmatprep.subr.bf16.mxu0 0
    %820 = vmatpush1.bf16.msra.mxu0 %v814
    %821 = vmatprep.subr.bf16.mxu0 0
    %822 = vmatpush1.bf16.msra.mxu0 0
    %823 = vmatprep.subr.bf16.mxu0 0
    %824 = vmatpush1.bf16.msra.mxu0 0
    %825 = vmatprep.subr.bf16.mxu0 0
    %826 = vmatpush1.bf16.msra.mxu0 0
    %827 = vmatprep.subr.bf16.mxu0 0
    %828 = vmatpush1.bf16.msra.mxu0 0
    %829 = vmatprep.subr.bf16.mxu0 0
    %830 = vmatpush1.bf16.msra.mxu0 0
    %831 = vmatprep.subr.bf16.mxu0 0
    %832 = vmatpush1.bf16.msra.mxu0 0
    %833 = vmatprep.subr.bf16.mxu0 0
    %834 = vmatpush1.bf16.msra.mxu0 0
    %835 = vmatprep.subr.bf16.mxu0 0
    %836 = vmatpush1.bf16.msra.mxu0 0
    %837 = vmatprep.subr.bf16.mxu0 0
    %838 = vmatpush1.bf16.msra.mxu0 0
    %839 = vmatprep.subr.bf16.mxu0 0
    %840 = vmatpush1.bf16.msra.mxu0 0
    %841 = vmatprep.subr.bf16.mxu0 0
    %842 = vmatpush1.bf16.msra.mxu0 0
    %843 = vmatprep.subr.bf16.mxu0 0
    %844 = vmatpush1.bf16.msra.mxu0 0
    %845 = vmatprep.subr.bf16.mxu0 0
    %846 = vmatpush1.bf16.msra.mxu0 0
    %847 = vmatprep.subr.bf16.mxu0 0
    %848 = vmatpush1.bf16.msra.mxu0 0
    %849 = vmatprep.subr.bf16.mxu0 0
    %850 = vmatpush1.bf16.msra.mxu0 0
    %851 = vmatprep.mubr.bf16.mxu0 0
    %852 = vmatmul.mubr.bf16.gmra.mrb[0].mxu0 %v817
    %v853 = vpop.f32.mrb[0].mxu0
    %v854 = vadd.f32 %v804, %v853
    %v855 = vpop.f32.mrb[0].mxu0
    %v856 = vpop.f32.mrb[0].mxu0
    %v857 = vadd.f32 %v807, %v856
    %v858 = vpop.f32.mrb[0].mxu0
    %859 = vdwg.mxu0
    %v860 = vld [vmem:[#allocation8] sm:$0x1]
    %v862 = vlaneseq
    %v863 = vshrl.u32 %v862, 7
    %v864 = vsub.s32 0, %v863
    %v865 = vrot.slane %v860, %v864
    %v867 = vadd.f32 %v854, %v865
    %v868 = vadd.f32 %v857, %v865
    %v869 = vadd.f32 %v237, %v867
    %v870 = vadd.f32 %v238, %v868
    %v871 = vsel %vm193, %v869, 0.0
    %872 = vadd.xlane.f32.xlu0 %v871
    %v873 = vpop.xlane.xlu0 %872
    %v874 = vsel %vm193, %v870, 0.0
    %875 = vadd.xlane.f32.xlu0 %v874
    %v876 = vpop.xlane.xlu0 %875
    %v877 = vmul.f32 %v873, %v200
    %v878 = vmul.f32 %v876, %v200
    %v879 = vsub.f32 %v869, %v877
    %v880 = vsub.f32 %v870, %v878
    %v881 = vmul.f32 %v879, %v879
    %v882 = vmul.f32 %v880, %v880
    %v883 = vsel %vm193, %v881, 0.0
    %884 = vadd.xlane.f32.xlu0 %v883
    %v885 = vpop.xlane.xlu0 %884
    %v886 = vsel %vm193, %v882, 0.0
    %887 = vadd.xlane.f32.xlu0 %v886
    %v888 = vpop.xlane.xlu0 %887
    %v889 = vmul.f32 %v885, %v200
    %v890 = vmul.f32 %v888, %v200
    %v891 = vadd.f32 %v889, 1e-12
    %v892 = vadd.f32 %v890, 1e-12
    %v893 = vrsqrt.pop %v891
    %v894 = vrsqrt.pop %v892
    %v895 = vmul.f32 %v879, %v893
    %v896 = vmul.f32 %v880, %v894
    %v897 = vld [vmem:[#allocation10] sm:$0x1]
    %v899 = vlaneseq
    %v900 = vshrl.u32 %v899, 7
    %v901 = vsub.s32 0, %v900
    %v902 = vrot.slane %v897, %v901
    %v904 = vmul.f32 %v895, %v902
    %v905 = vmul.f32 %v896, %v902
    %v906 = vld [vmem:[#allocation11] sm:$0x1]
    %v908 = vlaneseq
    %v909 = vshrl.u32 %v908, 7
    %v910 = vsub.s32 0, %v909
    %v911 = vrot.slane %v906, %v910
    %v913 = vadd.f32 %v904, %v911
    %v914 = vadd.f32 %v905, %v911
    %v915 = vpack.c.bf16 %v914, %v913
    %v916 = vld [vmem:[%s9] sm:$0xf]
    %v917 = vld [vmem:[%s9 + $0x4] sm:$0xf]
    %v918 = vld [vmem:[%s9 + $0x8] sm:$0xf]
    %v919 = vld [vmem:[%s9 + $0xc] sm:$0xf]
    %v920 = vld [vmem:[#allocation13] sm:$0x1]
    %v922 = vlaneseq
    %v923 = vshrl.u32 %v922, 7
    %v924 = vsub.s32 0, %v923
    %v925 = vrot.slane %v920, %v924
    %v931 = vunpack.c.l.b16 %v916
    %v932 = vunpack.c.l.b16 %v917
    %v933 = vunpack.c.l.b16 %v918
    %v934 = vunpack.c.l.b16 %v919
    %v935 = vpack.c.b16 %v932, %v931
    %v936 = vpack.c.b16 %v934, %v933
    %v940 = vsel %vm193, %v915, 0
    %942 = vmatprep.subr.bf16.mxu0 0
    %943 = vmatpush1.bf16.msra.mxu0 %v935
    %944 = vmatprep.subr.bf16.mxu0 0
    %945 = vmatpush1.bf16.msra.mxu0 %v936
    %946 = vmatprep.subr.bf16.mxu0 0
    %947 = vmatpush1.bf16.msra.mxu0 0
    %948 = vmatprep.subr.bf16.mxu0 0
    %949 = vmatpush1.bf16.msra.mxu0 0
    %950 = vmatprep.subr.bf16.mxu0 0
    %951 = vmatpush1.bf16.msra.mxu0 0
    %952 = vmatprep.subr.bf16.mxu0 0
    %953 = vmatpush1.bf16.msra.mxu0 0
    %954 = vmatprep.subr.bf16.mxu0 0
    %955 = vmatpush1.bf16.msra.mxu0 0
    %956 = vmatprep.subr.bf16.mxu0 0
    %957 = vmatpush1.bf16.msra.mxu0 0
    %958 = vmatprep.subr.bf16.mxu0 0
    %959 = vmatpush1.bf16.msra.mxu0 0
    %960 = vmatprep.subr.bf16.mxu0 0
    %961 = vmatpush1.bf16.msra.mxu0 0
    %962 = vmatprep.subr.bf16.mxu0 0
    %963 = vmatpush1.bf16.msra.mxu0 0
    %964 = vmatprep.subr.bf16.mxu0 0
    %965 = vmatpush1.bf16.msra.mxu0 0
    %966 = vmatprep.subr.bf16.mxu0 0
    %967 = vmatpush1.bf16.msra.mxu0 0
    %968 = vmatprep.subr.bf16.mxu0 0
    %969 = vmatpush1.bf16.msra.mxu0 0
    %970 = vmatprep.subr.bf16.mxu0 0
    %971 = vmatpush1.bf16.msra.mxu0 0
    %972 = vmatprep.subr.bf16.mxu0 0
    %973 = vmatpush1.bf16.msra.mxu0 0
    %974 = vmatprep.mubr.bf16.mxu0 0
    %975 = vmatmul.mubr.bf16.gmra.mrb[0].mxu0 %v940
    %v976 = vpop.f32.mrb[0].mxu0
    %v977 = vadd.f32 %v925, %v976
    %v978 = vpop.f32.mrb[0].mxu0
    %v979 = vpop.f32.mrb[0].mxu0
    %v980 = vadd.f32 %v925, %v979
    %v981 = vpop.f32.mrb[0].mxu0
    %982 = vdwg.mxu0
    %v983 = vmul.f32 %v977, %v977
    %v984 = vmul.f32 %v980, %v980
    %v985 = vmul.f32 %v977, %v983
    %v986 = vmul.f32 %v980, %v984
    %v987 = vmul.f32 %v985, 0.044715
    %v988 = vmul.f32 %v986, 0.044715
    %v989 = vadd.f32 %v977, %v987
    %v990 = vadd.f32 %v980, %v988
    %v991 = vmul.f32 %v989, 0.7978846
    %v992 = vmul.f32 %v990, 0.7978846
    %v993 = vtanh.pop %v991
    %v994 = vtanh.pop %v992
    %v995 = vadd.f32 %v993, 1.0
    %v996 = vadd.f32 %v994, 1.0
    %v997 = vmul.f32 %v995, 0.5
    %v998 = vmul.f32 %v996, 0.5
    %v999 = vmul.f32 %v977, %v997
    %v1000 = vmul.f32 %v980, %v998
    %v1001 = vpack.c.bf16 %v1000, %v999
    %v1002 = vld [vmem:[%s11] sm:$0xf]
    %v1003 = vld [vmem:[%s11 + $0x4] sm:$0xf]
    %v1004 = vld [vmem:[%s11 + $0x8] sm:$0xf]
    %v1005 = vld [vmem:[%s11 + $0xc] sm:$0xf]
    %v1006 = vld [vmem:[%s11 + $0x10] sm:$0xf]
    %v1007 = vld [vmem:[%s11 + $0x14] sm:$0xf]
    %v1008 = vld [vmem:[%s11 + $0x18] sm:$0xf]
    %v1009 = vld [vmem:[%s11 + $0x1c] sm:$0xf]
    %v1010 = vld [vmem:[#allocation14] sm:$0x1]
    %v1012 = vlaneseq
    %v1013 = vshrl.u32 %v1012, 7
    %v1014 = vsub.s32 0, %v1013
    %v1015 = vrot.slane %v1010, %v1014
    %v1025 = vunpack.c.l.b16 %v1002
    %v1026 = vunpack.c.l.b16 %v1003
    %v1027 = vunpack.c.l.b16 %v1004
    %v1028 = vunpack.c.l.b16 %v1005
    %v1029 = vunpack.c.l.b16 %v1006
    %v1030 = vunpack.c.l.b16 %v1007
    %v1031 = vunpack.c.l.b16 %v1008
    %v1032 = vunpack.c.l.b16 %v1009
    %v1033 = vpack.c.b16 %v1026, %v1025
    %v1034 = vpack.c.b16 %v1028, %v1027
    %v1035 = vpack.c.b16 %v1030, %v1029
    %v1036 = vpack.c.b16 %v1032, %v1031
    %vm1041 = vcmask 523264
    %v1043 = vsel %vm1041, %v1001, 0
    %1045 = vmatprep.subr.bf16.mxu0 0
    %1046 = vmatpush1.bf16.msra.mxu0 %v1033
    %1047 = vmatprep.subr.bf16.mxu0 0
    %1048 = vmatpush1.bf16.msra.mxu0 %v1034
    %1049 = vmatprep.subr.bf16.mxu0 0
    %1050 = vmatpush1.bf16.msra.mxu0 %v1035
    %1051 = vmatprep.subr.bf16.mxu0 0
    %1052 = vmatpush1.bf16.msra.mxu0 %v1036
    %1053 = vmatprep.subr.bf16.mxu0 0
    %1054 = vmatpush1.bf16.msra.mxu0 0
    %1055 = vmatprep.subr.bf16.mxu0 0
    %1056 = vmatpush1.bf16.msra.mxu0 0
    %1057 = vmatprep.subr.bf16.mxu0 0
    %1058 = vmatpush1.bf16.msra.mxu0 0
    %1059 = vmatprep.subr.bf16.mxu0 0
    %1060 = vmatpush1.bf16.msra.mxu0 0
    %1061 = vmatprep.subr.bf16.mxu0 0
    %1062 = vmatpush1.bf16.msra.mxu0 0
    %1063 = vmatprep.subr.bf16.mxu0 0
    %1064 = vmatpush1.bf16.msra.mxu0 0
    %1065 = vmatprep.subr.bf16.mxu0 0
    %1066 = vmatpush1.bf16.msra.mxu0 0
    %1067 = vmatprep.subr.bf16.mxu0 0
    %1068 = vmatpush1.bf16.msra.mxu0 0
    %1069 = vmatprep.subr.bf16.mxu0 0
    %1070 = vmatpush1.bf16.msra.mxu0 0
    %1071 = vmatprep.subr.bf16.mxu0 0
    %1072 = vmatpush1.bf16.msra.mxu0 0
    %1073 = vmatprep.subr.bf16.mxu0 0
    %1074 = vmatpush1.bf16.msra.mxu0 0
    %1075 = vmatprep.subr.bf16.mxu0 0
    %1076 = vmatpush1.bf16.msra.mxu0 0
    %1077 = vmatprep.mubr.bf16.mxu0 0
    %1078 = vmatmul.mubr.bf16.gmra.mrb[0].mxu0 %v1043
    %v1079 = vpop.f32.mrb[0].mxu0
    %v1080 = vadd.f32 %v1015, %v1079
    %v1081 = vpop.f32.mrb[0].mxu0
    %v1082 = vpop.f32.mrb[0].mxu0
    %v1083 = vadd.f32 %v1015, %v1082
    %v1084 = vpop.f32.mrb[0].mxu0
    %1085 = vdwg.mxu0
    %v1086 = vadd.f32 %v913, %v1080
    %v1087 = vadd.f32 %v914, %v1083
    %v1088 = vsel %vm193, %v1086, 0.0
    %1089 = vadd.xlane.f32.xlu0 %v1088
    %v1090 = vpop.xlane.xlu0 %1089
    %v1091 = vsel %vm193, %v1087, 0.0
    %1092 = vadd.xlane.f32.xlu0 %v1091
    %v1093 = vpop.xlane.xlu0 %1092
    %v1094 = vmul.f32 %v1090, %v200
    %v1095 = vmul.f32 %v1093, %v200
    %v1096 = vsub.f32 %v1086, %v1094
    %v1097 = vsub.f32 %v1087, %v1095
    %v1098 = vmul.f32 %v1096, %v1096
    %v1099 = vmul.f32 %v1097, %v1097
    %v1100 = vsel %vm193, %v1098, 0.0
    %1101 = vadd.xlane.f32.xlu0 %v1100
    %v1102 = vpop.xlane.xlu0 %1101
    %v1103 = vsel %vm193, %v1099, 0.0
    %1104 = vadd.xlane.f32.xlu0 %v1103
    %v1105 = vpop.xlane.xlu0 %1104
    %v1106 = vmul.f32 %v1102, %v200
    %v1107 = vmul.f32 %v1105, %v200
    %v1108 = vadd.f32 %v1106, 1e-12
    %v1109 = vadd.f32 %v1107, 1e-12
    %v1110 = vrsqrt.pop %v1108
    %v1111 = vrsqrt.pop %v1109
    %v1112 = vmul.f32 %v1096, %v1110
    %v1113 = vmul.f32 %v1097, %v1111
    %v1114 = vld [vmem:[#allocation16] sm:$0x1]
    %v1116 = vlaneseq
    %v1117 = vshrl.u32 %v1116, 7
    %v1118 = vsub.s32 0, %v1117
    %v1119 = vrot.slane %v1114, %v1118
    %v1121 = vmul.f32 %v1112, %v1119
    %v1122 = vmul.f32 %v1113, %v1119
    %v1123 = vld [vmem:[#allocation17] sm:$0x1]
    %v1125 = vlaneseq
    %v1126 = vshrl.u32 %v1125, 7
    %v1127 = vsub.s32 0, %v1126
    %v1128 = vrot.slane %v1123, %v1127
    %v1130 = vadd.f32 %v1121, %v1128
    %v1131 = vadd.f32 %v1122, %v1128
    %v1132 = vpack.c.bf16 %v1130, %v1130
    %v1133 = vpack.c.bf16 %v1131, %v1131
    %v1134 = vld [vmem:[%s15] sm:$0xf]
    %v1135 = vld [vmem:[%s15 + $0x4] sm:$0xf]
    %v1136 = vld [vmem:[%s15 + $0x8] sm:$0xf]
    %v1137 = vld [vmem:[%s15 + $0xc] sm:$0xf]
    %v1138 = vld [vmem:[#allocation19] sm:$0x1]
    %v1140 = vlaneseq
    %v1141 = vshrl.u32 %v1140, 7
    %v1142 = vsub.s32 0, %v1141
    %v1143 = vrot.slane %v1138, %v1142
    %v1147 = vunpack.c.l.b16 %v1132
    %v1148 = vunpack.c.l.b16 %v1133
    %v1149 = vrot.slane %v1148, 7
    %vm1150 = vcmask 1041409
    %v1151 = vsel %vm1150, %v1149, %v1147
    %v1152 = vpack.c.b16 %v1151, %v1151
    %v1157 = vunpack.c.l.b16 %v1134
    %v1158 = vunpack.c.l.b16 %v1135
    %v1159 = vunpack.c.l.b16 %v1136
    %v1160 = vunpack.c.l.b16 %v1137
    %v1161 = vpack.c.b16 %v1158, %v1157
    %v1162 = vpack.c.b16 %v1160, %v1159
    %v1166 = vsel %vm193, %v1152, 0
    %1168 = vmatprep.subr.bf16.mxu0 0
    %1169 = vmatpush1.bf16.msra.mxu0 %v1161
    %1170 = vmatprep.subr.bf16.mxu0 0
    %1171 = vmatpush1.bf16.msra.mxu0 %v1162
    %1172 = vmatprep.subr.bf16.mxu0 0
    %1173 = vmatpush1.bf16.msra.mxu0 0
    %1174 = vmatprep.subr.bf16.mxu0 0
    %1175 = vmatpush1.bf16.msra.mxu0 0
    %1176 = vmatprep.subr.bf16.mxu0 0
    %1177 = vmatpush1.bf16.msra.mxu0 0
    %1178 = vmatprep.subr.bf16.mxu0 0
    %1179 = vmatpush1.bf16.msra.mxu0 0
    %1180 = vmatprep.subr.bf16.mxu0 0
    %1181 = vmatpush1.bf16.msra.mxu0 0
    %1182 = vmatprep.subr.bf16.mxu0 0
    %1183 = vmatpush1.bf16.msra.mxu0 0
    %1184 = vmatprep.subr.bf16.mxu0 0
    %1185 = vmatpush1.bf16.msra.mxu0 0
    %1186 = vmatprep.subr.bf16.mxu0 0
    %1187 = vmatpush1.bf16.msra.mxu0 0
    %1188 = vmatprep.subr.bf16.mxu0 0
    %1189 = vmatpush1.bf16.msra.mxu0 0
    %1190 = vmatprep.subr.bf16.mxu0 0
    %1191 = vmatpush1.bf16.msra.mxu0 0
    %1192 = vmatprep.subr.bf16.mxu0 0
    %1193 = vmatpush1.bf16.msra.mxu0 0
    %1194 = vmatprep.subr.bf16.mxu0 0
    %1195 = vmatpush1.bf16.msra.mxu0 0
    %1196 = vmatprep.subr.bf16.mxu0 0
    %1197 = vmatpush1.bf16.msra.mxu0 0
    %1198 = vmatprep.subr.bf16.mxu0 0
    %1199 = vmatpush1.bf16.msra.mxu0 0
    %1200 = vmatprep.mubr.bf16.mxu0 0
    %1201 = vmatmul.mubr.bf16.gmra.mrb[0].mxu0 %v1166
    %v1202 = vpop.f32.mrb[0].mxu0
    %v1203 = vadd.f32 %v1143, %v1202
    %v1204 = vpop.f32.mrb[0].mxu0
    %v1205 = vpop.f32.mrb[0].mxu0
    %v1206 = vpop.f32.mrb[0].mxu0
    %1207 = vdwg.mxu0
    %v1208 = vtanh.pop %v1203
    %v1209 = vpack.c.bf16 %v1208, %v1208
    %v1210 = vld [vmem:[%s17] sm:$0xf]
    %v1211 = vld [vmem:[%s17 + $0x4] sm:$0xf]
    %v1212 = vld [vmem:[%s17 + $0x8] sm:$0xf]
    %v1213 = vld [vmem:[%s17 + $0xc] sm:$0xf]
    %v1214 = vld [vmem:[%s18] sm:$0x1]
    %v1216 = vlaneseq
    %v1217 = vshrl.u32 %v1216, 7
    %v1218 = vsub.s32 0, %v1217
    %v1219 = vrot.slane %v1214, %v1218
    %v1225 = vunpack.c.l.b16 %v1210
    %v1226 = vunpack.c.l.b16 %v1211
    %v1227 = vunpack.c.l.b16 %v1212
    %v1228 = vunpack.c.l.b16 %v1213
    %v1229 = vpack.c.b16 %v1226, %v1225
    %v1230 = vpack.c.b16 %v1228, %v1227
    %v1234 = vsel %vm193, %v1209, 0
    %1236 = vmatprep.subr.bf16.mxu0 0
    %1237 = vmatpush1.bf16.msra.mxu0 %v1229
    %1238 = vmatprep.subr.bf16.mxu0 0
    %1239 = vmatpush1.bf16.msra.mxu0 %v1230
    %1240 = vmatprep.subr.bf16.mxu0 0
    %1241 = vmatpush1.bf16.msra.mxu0 0
    %1242 = vmatprep.subr.bf16.mxu0 0
    %1243 = vmatpush1.bf16.msra.mxu0 0
    %1244 = vmatprep.subr.bf16.mxu0 0
    %1245 = vmatpush1.bf16.msra.mxu0 0
    %1246 = vmatprep.subr.bf16.mxu0 0
    %1247 = vmatpush1.bf16.msra.mxu0 0
    %1248 = vmatprep.subr.bf16.mxu0 0
    %1249 = vmatpush1.bf16.msra.mxu0 0
    %1250 = vmatprep.subr.bf16.mxu0 0
    %1251 = vmatpush1.bf16.msra.mxu0 0
    %1252 = vmatprep.subr.bf16.mxu0 0
    %1253 = vmatpush1.bf16.msra.mxu0 0
    %1254 = vmatprep.subr.bf16.mxu0 0
    %1255 = vmatpush1.bf16.msra.mxu0 0
    %1256 = vmatprep.subr.bf16.mxu0 0
    %1257 = vmatpush1.bf16.msra.mxu0 0
    %1258 = vmatprep.subr.bf16.mxu0 0
    %1259 = vmatpush1.bf16.msra.mxu0 0
    %1260 = vmatprep.subr.bf16.mxu0 0
    %1261 = vmatpush1.bf16.msra.mxu0 0
    %1262 = vmatprep.subr.bf16.mxu0 0
    %1263 = vmatpush1.bf16.msra.mxu0 0
    %1264 = vmatprep.subr.bf16.mxu0 0
    %1265 = vmatpush1.bf16.msra.mxu0 0
    %1266 = vmatprep.subr.bf16.mxu0 0
    %1267 = vmatpush1.bf16.msra.mxu0 0
    %1268 = vmatprep.mubr.bf16.mxu0 0
    %1269 = vmatmul.mubr.bf16.gmra.mrb[0].mxu0 %v1234
    %v1270 = vpop.f32.mrb[0].mxu0
    %v1271 = vadd.f32 %v1219, %v1270
    %v1272 = vpop.f32.mrb[0].mxu0
    %v1273 = vpop.f32.mrb[0].mxu0
    %v1274 = vpop.f32.mrb[0].mxu0
    %1275 = vdwg.mxu0
    %1276 = vst [vmem:[#allocation20] sm:$0x3] %v1271
    // Predicated region
    $region122: #{tpu_custom_call.1} parent=1 // pred_check
      _
    $region123: #{tpu_custom_call.1} parent=1 // pred_check_branch
      %1278 = sbr.rel (0) target = $region125
    $region124: #{tpu_custom_call.1} parent=1 // pred_region
      %s1280 = ssub.s32 32, 32
      %1281 = vsyncadd [#allocation4], %s1280
      %s1283 = sshll.u32 [#allocation20], 4
      %s1284 = int_to_ptr.vmem [resolvable:$true] %s1283
      %1286 = dma.vmem_to_hbm [thread:$0]  %s1284, 32, %s19, [#allocation4]
    $region125: #{tpu_custom_call.1} parent=1 // pred_fallthru
      _
    // Predicated region
    $region126: #{tpu_custom_call.1} parent=1 // pred_check
      _
    $region127: #{tpu_custom_call.1} parent=1 // pred_check_branch
      %1288 = sbr.rel (0) target = $region129
    $region128: #{tpu_custom_call.1} parent=1 // pred_region
      %1289 = dma.done [#allocation4], 32
    $region129: #{tpu_custom_call.1} parent=1 // pred_fallthru
      _
    %1290 = vsyncpa [#allocation3], 1
    %1291 = vsyncpa [#allocation6], 1
    %1292 = vsyncpa [#allocation9], 1
    %1293 = vsyncpa [#allocation12], 1
    %1294 = vsyncpa [#allocation15], 1
    %1295 = vsyncpa [#allocation18], 1
    %1296 = vsyncpa [#allocation4], 1

</llo_original>
